<compile_context>
chip_gen: v7x
topology: tpu7x:2x2x1
jax: 0.10.0
libtpu: 0.0.40
codegen_flags: <defaults>
</compile_context>

<pallas_src>
import functools
import math

import jax
import jax.numpy as jnp
from jax.experimental import pallas as pl
from jax.experimental.pallas import tpu as pltpu

_MiB = 1024 * 1024


# ----------------------------- kernel helpers -------------------------------

def _activate(f, activation, approx_gelu):
    if activation == 'relu':
        return jnp.maximum(f, 0.0)
    if approx_gelu:
        # tanh-approx GELU: tanh issues on the EUP slot, freeing the VALU.
        c = math.sqrt(2.0 / math.pi)
        return 0.5 * f * (1.0 + jnp.tanh(c * (f + 0.044715 * f * f * f)))
    # DistilBERT's exact gelu: 0.5 * x * (1 + erf(x / sqrt(2)))
    return 0.5 * f * (1.0 + jax.lax.erf(f * (1.0 / math.sqrt(2.0))))


def _choose_tm(M):
    # MXU/sublane-friendly row tiles; prefer >= 2 row tiles (v7x has 2 TCs).
    cands = (1024, 512, 256, 128, 64, 32, 16, 8)
    for c in cands:
        if M % c == 0 and M // c >= 2:
            return c
    for c in cands:
        if c <= M and pl.cdiv(M, c) >= 2:
            return c
    return 8


def _choose_th(H):
    for c in (1024, 512, 256, 128):
        if H % c == 0:
            return c
    return H


def _vmem_capacity_bytes():
    try:
        return int(pltpu.get_tpu_info().vmem_capacity_bytes)
    except Exception:
        return 64 * _MiB                      # conservative (v7x-sized VMEM)


def _weight_spec(shape, index_map, single_buffer):
    if single_buffer:
        # Constant-index resident blocks are fetched once; one buffer is enough.
        return pl.BlockSpec(shape, index_map, pipeline_mode=pl.Buffered(1))
    return pl.BlockSpec(shape, index_map)


# --------------------------------- kernels -----------------------------------

def ffn_resident_kernel(activation, approx_gelu, n_chunks, th,
                        x_ref, w1_ref, b1_ref, w2_ref, b2_ref, out_ref):
    """One (tm, D) row tile; full W1/W2 VMEM-resident; unrolled H-chunk loop."""
    xb = x_ref[...].astype(jnp.bfloat16)              # cast in-kernel (bf16 MXU)
    out_ref[...] = jnp.broadcast_to(b2_ref[...], out_ref.shape)
    for c in range(n_chunks):                         # short, fully unrolled
        lo = c * th
        f = jnp.dot(xb, w1_ref[:, lo:lo + th],
                    preferred_element_type=jnp.float32)
        f = _activate(f + b1_ref[:, lo:lo + th], activation, approx_gelu)
        out_ref[...] += jnp.dot(f.astype(jnp.bfloat16), w2_ref[lo:lo + th, :],
                                preferred_element_type=jnp.float32)


def ffn_streamed_kernel(activation, approx_gelu,
                        x_ref, w1_ref, b1_ref, w2_ref, b2_ref, out_ref):
    """One (tm, D) row tile x one (th,) hidden chunk; accumulate into out_ref."""
    h = pl.program_id(1)

    @pl.when(h == 0)
    def _():
        out_ref[...] = jnp.broadcast_to(b2_ref[...], out_ref.shape)

    xb = x_ref[...].astype(jnp.bfloat16)
    f = jnp.dot(xb, w1_ref[...], preferred_element_type=jnp.float32)
    f = _activate(f + b1_ref[...], activation, approx_gelu)
    out_ref[...] += jnp.dot(f.astype(jnp.bfloat16), w2_ref[...],
                            preferred_element_type=jnp.float32)


# -------------------------------- wrapper ------------------------------------

def ffn_forward(x, params, activation, *, tm=None, th=None, resident=None,
                approx_gelu=False):
    """FFN.forward.  x: (..., D).  Weights stored pre-transposed (in, out);
    persist them in bf16 once outside the per-call hot path for best perf."""
    assert activation in ('relu', 'gelu')
    # TODO(synk): training-mode nn.Dropout (RNG mask) not implemented; eval
    # forward (identity) only.

    w1 = params['w1']
    w2 = params['w2']
    b1 = params['b1'].reshape(1, -1).astype(jnp.float32)
    b2 = params['b2'].reshape(1, -1).astype(jnp.float32)
    D = x.shape[-1]
    H = w1.shape[1]
    assert w1.shape == (D, H) and w2.shape == (H, D)

    # bf16 MXU weights (no-op when already persisted as bf16).
    w1b = w1 if w1.dtype == jnp.bfloat16 else w1.astype(jnp.bfloat16)
    w2b = w2 if w2.dtype == jnp.bfloat16 else w2.astype(jnp.bfloat16)

    orig_shape = x.shape
    M = math.prod(orig_shape[:-1])
    x2 = x.reshape(M, D).astype(jnp.float32)   # stays f32; cast to bf16 in-kernel

    tm = tm if tm is not None else _choose_tm(M)
    th = th if th is not None else _choose_th(H)
    assert tm % 8 == 0 and (th % 128 == 0 or th == H), (tm, th)
    assert H % th == 0, (H, th)

    # Pad the row axis so it divides the row tile (handles arbitrary B*S).
    Mp = pl.cdiv(M, tm) * tm
    if Mp != M:
        x2 = jnp.pad(x2, ((0, Mp - M), (0, 0)))

    phys = _vmem_capacity_bytes()
    # Worst-case resident footprint: (possibly) double-buffered weights +
    # x/out tiles (2 bufs each, f32) + live (tm, th) intermediate + slack.
    est_resident = (2 * (D * H * 2 + H * 4 + H * D * 2 + D * 4)
                    + 4 * tm * D * 4 + tm * th * 8 + 4 * _MiB)
    est_streamed = (2 * (tm * D * 4 + D * th * 2 + th * 4 + th * D * 2 + D * 4)
                    + 2 * tm * D * 4 + tm * th * 8 + 4 * _MiB)
    if resident is None:
        resident = est_resident <= 0.7 * phys

    est = est_resident if resident else est_streamed
    vmem_limit = min(max(int(1.4 * est), 32 * _MiB), int(0.8 * phys))

    out_shape = jax.ShapeDtypeStruct((Mp, D), jnp.float32)

    if resident:
        kernel = functools.partial(ffn_resident_kernel, activation, approx_gelu,
                                   H // th, th)

        def run(single_buffer):
            return pl.pallas_call(
                kernel,
                out_shape=out_shape,
                grid_spec=pltpu.PrefetchScalarGridSpec(
                    num_scalar_prefetch=0,
                    grid=(Mp // tm,),
                    in_specs=[
                        pl.BlockSpec((tm, D), lambda m: (m, 0)),           # x rows (f32)
                        _weight_spec((D, H), lambda m: (0, 0), single_buffer),  # W1
                        _weight_spec((1, H), lambda m: (0, 0), single_buffer),  # b1
                        _weight_spec((H, D), lambda m: (0, 0), single_buffer),  # W2
                        _weight_spec((1, D), lambda m: (0, 0), single_buffer),  # b2
                    ],
                    out_specs=pl.BlockSpec((tm, D), lambda m: (m, 0)),
                ),
                compiler_params=pltpu.CompilerParams(
                    dimension_semantics=("parallel",),
                    vmem_limit_bytes=vmem_limit),
            )(x2, w1b, b1, w2b, b2)

        try:
            out2 = run(True)            # single-buffered resident weights
        except Exception:               # pl.Buffered(1) unsupported -> fallback
            out2 = run(False)
    else:
        kernel = functools.partial(ffn_streamed_kernel, activation, approx_gelu)
        out2 = pl.pallas_call(
            kernel,
            out_shape=out_shape,
            grid_spec=pltpu.PrefetchScalarGridSpec(
                num_scalar_prefetch=0,
                grid=(Mp // tm, H // th),              # reduction axis last
                in_specs=[
                    pl.BlockSpec((tm, D), lambda m, h: (m, 0)),   # x rows (f32)
                    pl.BlockSpec((D, th), lambda m, h: (0, h)),   # W1 chunk (bf16)
                    pl.BlockSpec((1, th), lambda m, h: (0, h)),   # b1 chunk (f32)
                    pl.BlockSpec((th, D), lambda m, h: (h, 0)),   # W2 chunk (bf16)
                    pl.BlockSpec((1, D),  lambda m, h: (0, 0)),   # b2 (f32, tiny)
                ],
                out_specs=pl.BlockSpec((tm, D), lambda m, h: (m, 0)),
            ),
            compiler_params=pltpu.CompilerParams(
                dimension_semantics=("parallel", "arbitrary"),
                vmem_limit_bytes=vmem_limit),
        )(x2, w1b, b1, w2b, b2)

    return out2[:M].reshape(orig_shape)


# ------------------------------ pure-JAX reference ---------------------------

def _ref_ffn(x, params, activation, approx_gelu=False):
    """Mirrors the kernel's precision choices (bf16 MXU inputs, f32 accum)."""
    w1 = params['w1'].astype(jnp.bfloat16)
    w2 = params['w2'].astype(jnp.bfloat16)
    b1 = params['b1'].reshape(1, -1).astype(jnp.float32)
    b2 = params['b2'].reshape(1, -1).astype(jnp.float32)
    f = jnp.dot(x.astype(jnp.bfloat16), w1,
                preferred_element_type=jnp.float32) + b1
    f = _activate(f, activation, approx_gelu)
    out = jnp.dot(f.astype(jnp.bfloat16), w2,
                  preferred_element_type=jnp.float32) + b2
    return out


# ----------------------------------- main ------------------------------------

if __name__ == "__main__":
    B, S, dim, hidden_dim = 2, 8, 32, 256

    root = jax.random.PRNGKey(0)
    kx, kw1, kb1, kw2, kb2 = jax.random.split(root, 5)
    x = jax.random.normal(kx, (B, S, dim), jnp.float32)

    def lin_init(kw, kb, fan_in, fan_out):
        # PyTorch nn.Linear default: U(-1/sqrt(fan_in), 1/sqrt(fan_in)),
        # stored pre-transposed as (in_features, out_features).
        bound = 1.0 / math.sqrt(fan_in)
        w = jax.random.uniform(kw, (fan_in, fan_out), jnp.float32, -bound, bound)
        b = jax.random.uniform(kb, (1, fan_out), jnp.float32, -bound, bound)
        return w, b

    w1, b1 = lin_init(kw1, kb1, dim, hidden_dim)
    w2, b2 = lin_init(kw2, kb2, hidden_dim, dim)
    # Persist MXU weights in bf16 once, outside the per-call hot path.
    params = dict(w1=w1.astype(jnp.bfloat16), b1=b1,
                  w2=w2.astype(jnp.bfloat16), b2=b2)

    def check(out, ref, name, tol=5e-4):
        assert out.shape == ref.shape, (name, out.shape, ref.shape)
        err = jnp.max(jnp.abs(out - ref))
        assert jnp.allclose(out, ref, atol=tol, rtol=tol), \
            f"{name}: max abs err {err}"

    # 1) gelu, resident-weights path, th=128 -> 2-chunk inner reduction loop.
    out = jax.block_until_ready(ffn_forward(x, params, 'gelu', th=128))
    check(out, _ref_ffn(x, params, 'gelu'), 'gelu/resident')

    # 2) relu, forced streamed path (2-D grid), th=128 -> 2 reduction steps,
    #    exercising the out_ref-resident accumulation across the h axis.
    out = jax.block_until_ready(
        ffn_forward(x, params, 'relu', th=128, resident=False))
    check(out, _ref_ffn(x, params, 'relu'), 'relu/streamed')

    # 3) gelu with tanh-approx activation (EUP path).
    out = jax.block_until_ready(ffn_forward(x, params, 'gelu', approx_gelu=True))
    check(out, _ref_ffn(x, params, 'gelu', approx_gelu=True), 'gelu/approx')

    # 4) non-divisible row count -> padded row axis.
    x_odd = jax.random.normal(kx, (B, S - 3, dim), jnp.float32)
    out = jax.block_until_ready(ffn_forward(x_odd, params, 'gelu'))
    check(out, _ref_ffn(x_odd, params, 'gelu'), 'gelu/padded')

    print("KERNEL_OK")
</pallas_src>

<mosaic_0001>
module attributes {stable_mosaic.version = 11 : i64} {
  func.func @ffn_resident_kernel(%arg0: i32, %arg1: memref<8x32xf32, #tpu.memory_space<vmem>>, %arg2: memref<32x256xbf16, #tpu.memory_space<vmem>>, %arg3: memref<1x256xf32, #tpu.memory_space<vmem>>, %arg4: memref<256x32xbf16, #tpu.memory_space<vmem>>, %arg5: memref<1x32xf32, #tpu.memory_space<vmem>>, %arg6: memref<8x32xf32, #tpu.memory_space<vmem>>) attributes {dimension_semantics = [#tpu.dimension_semantics<parallel>], iteration_bounds = array<i64: 2>, scalar_prefetch = 0 : i64, scratch_operands = 0 : i64, tpu.core_type = #tpu.core_type<tc>, window_params = [{transform_indices = @transform_0, window_bounds = array<i64: 8, 32>}, {pipeline_mode = #tpu.pipeline_mode<synchronous>, transform_indices = @transform_1, window_bounds = array<i64: 32, 256>}, {pipeline_mode = #tpu.pipeline_mode<synchronous>, transform_indices = @transform_2, window_bounds = array<i64: 1, 256>}, {pipeline_mode = #tpu.pipeline_mode<synchronous>, transform_indices = @transform_3, window_bounds = array<i64: 256, 32>}, {pipeline_mode = #tpu.pipeline_mode<synchronous>, transform_indices = @transform_4, window_bounds = array<i64: 1, 32>}, {transform_indices = @transform_5, window_bounds = array<i64: 8, 32>}]} {
    %c0 = arith.constant 0 : index
    %c0_0 = arith.constant 0 : index
    %0 = vector.load %arg1[%c0, %c0_0] : memref<8x32xf32, #tpu.memory_space<vmem>>, vector<8x32xf32>
    %1 = arith.truncf %0 : vector<8x32xf32> to vector<8x32xbf16>
    %c0_1 = arith.constant 0 : index
    %c0_2 = arith.constant 0 : index
    %2 = vector.load %arg5[%c0_1, %c0_2] : memref<1x32xf32, #tpu.memory_space<vmem>>, vector<1x32xf32>
    %3 = vector.shape_cast %2 : vector<1x32xf32> to vector<1x32xf32>
    %4 = vector.broadcast %3 : vector<1x32xf32> to vector<8x32xf32>
    %c0_3 = arith.constant 0 : index
    %c0_4 = arith.constant 0 : index
    %5 = vector.load %arg6[%c0_3, %c0_4] : memref<8x32xf32, #tpu.memory_space<vmem>>, vector<8x32xf32>
    tpu.vector_store %arg6[%c0_3, %c0_4], %4 {strides = array<i32>} : memref<8x32xf32, #tpu.memory_space<vmem>>, vector<8x32xf32>,
    %c0_5 = arith.constant 0 : index
    %c0_6 = arith.constant 0 : index
    %6 = vector.load %arg2[%c0_5, %c0_6] : memref<32x256xbf16, #tpu.memory_space<vmem>>, vector<32x128xbf16>
    %cst = arith.constant dense<0.000000e+00> : vector<8x128xf32>
    %7 = tpu.matmul %1, %6, %cst {dimension_numbers = #tpu.dot_dimension_numbers<[1], [0], [0], [1], [0, 0, 1, 1], [], []>} : vector<8x32xbf16>, vector<32x128xbf16>, vector<8x128xf32> -> vector<8x128xf32>
    %c0_7 = arith.constant 0 : index
    %c0_8 = arith.constant 0 : index
    %8 = vector.load %arg3[%c0_7, %c0_8] : memref<1x256xf32, #tpu.memory_space<vmem>>, vector<1x128xf32>
    %9 = vector.broadcast %8 : vector<1x128xf32> to vector<8x128xf32>
    %10 = arith.addf %7, %9 : vector<8x128xf32>
    %cst_9 = arith.constant 5.000000e-01 : f32
    %11 = vector.broadcast %cst_9 : f32 to vector<8x128xf32>
    %12 = arith.mulf %11, %10 : vector<8x128xf32>
    %cst_10 = arith.constant 0.707106769 : f32
    %13 = vector.broadcast %cst_10 : f32 to vector<8x128xf32>
    %14 = arith.mulf %10, %13 : vector<8x128xf32>
    %15 = math.erf %14 : vector<8x128xf32>
    %cst_11 = arith.constant 1.000000e+00 : f32
    %16 = vector.broadcast %cst_11 : f32 to vector<8x128xf32>
    %17 = arith.addf %16, %15 : vector<8x128xf32>
    %18 = arith.mulf %12, %17 : vector<8x128xf32>
    %c0_12 = arith.constant 0 : index
    %c0_13 = arith.constant 0 : index
    %19 = vector.load %arg6[%c0_12, %c0_13] : memref<8x32xf32, #tpu.memory_space<vmem>>, vector<8x32xf32>
    %20 = arith.truncf %18 : vector<8x128xf32> to vector<8x128xbf16>
    %c0_14 = arith.constant 0 : index
    %c0_15 = arith.constant 0 : index
    %21 = vector.load %arg4[%c0_14, %c0_15] : memref<256x32xbf16, #tpu.memory_space<vmem>>, vector<128x32xbf16>
    %cst_16 = arith.constant dense<0.000000e+00> : vector<8x32xf32>
    %22 = tpu.matmul %20, %21, %cst_16 {dimension_numbers = #tpu.dot_dimension_numbers<[1], [0], [0], [1], [0, 0, 1, 1], [], []>} : vector<8x128xbf16>, vector<128x32xbf16>, vector<8x32xf32> -> vector<8x32xf32>
    %23 = arith.addf %19, %22 : vector<8x32xf32>
    %c0_17 = arith.constant 0 : index
    %c0_18 = arith.constant 0 : index
    %24 = vector.load %arg6[%c0_17, %c0_18] : memref<8x32xf32, #tpu.memory_space<vmem>>, vector<8x32xf32>
    tpu.vector_store %arg6[%c0_17, %c0_18], %23 {strides = array<i32>} : memref<8x32xf32, #tpu.memory_space<vmem>>, vector<8x32xf32>,
    %c0_19 = arith.constant 0 : index
    %c128 = arith.constant 128 : index
    %25 = vector.load %arg2[%c0_19, %c128] : memref<32x256xbf16, #tpu.memory_space<vmem>>, vector<32x128xbf16>
    %cst_20 = arith.constant dense<0.000000e+00> : vector<8x128xf32>
    %26 = tpu.matmul %1, %25, %cst_20 {dimension_numbers = #tpu.dot_dimension_numbers<[1], [0], [0], [1], [0, 0, 1, 1], [], []>} : vector<8x32xbf16>, vector<32x128xbf16>, vector<8x128xf32> -> vector<8x128xf32>
    %c0_21 = arith.constant 0 : index
    %c128_22 = arith.constant 128 : index
    %27 = vector.load %arg3[%c0_21, %c128_22] : memref<1x256xf32, #tpu.memory_space<vmem>>, vector<1x128xf32>
    %28 = vector.broadcast %27 : vector<1x128xf32> to vector<8x128xf32>
    %29 = arith.addf %26, %28 : vector<8x128xf32>
    %cst_23 = arith.constant 5.000000e-01 : f32
    %30 = vector.broadcast %cst_23 : f32 to vector<8x128xf32>
    %31 = arith.mulf %30, %29 : vector<8x128xf32>
    %cst_24 = arith.constant 0.707106769 : f32
    %32 = vector.broadcast %cst_24 : f32 to vector<8x128xf32>
    %33 = arith.mulf %29, %32 : vector<8x128xf32>
    %34 = math.erf %33 : vector<8x128xf32>
    %cst_25 = arith.constant 1.000000e+00 : f32
    %35 = vector.broadcast %cst_25 : f32 to vector<8x128xf32>
    %36 = arith.addf %35, %34 : vector<8x128xf32>
    %37 = arith.mulf %31, %36 : vector<8x128xf32>
    %c0_26 = arith.constant 0 : index
    %c0_27 = arith.constant 0 : index
    %38 = vector.load %arg6[%c0_26, %c0_27] : memref<8x32xf32, #tpu.memory_space<vmem>>, vector<8x32xf32>
    %39 = arith.truncf %37 : vector<8x128xf32> to vector<8x128xbf16>
    %c128_28 = arith.constant 128 : index
    %c0_29 = arith.constant 0 : index
    %40 = vector.load %arg4[%c128_28, %c0_29] : memref<256x32xbf16, #tpu.memory_space<vmem>>, vector<128x32xbf16>
    %cst_30 = arith.constant dense<0.000000e+00> : vector<8x32xf32>
    %41 = tpu.matmul %39, %40, %cst_30 {dimension_numbers = #tpu.dot_dimension_numbers<[1], [0], [0], [1], [0, 0, 1, 1], [], []>} : vector<8x128xbf16>, vector<128x32xbf16>, vector<8x32xf32> -> vector<8x32xf32>
    %42 = arith.addf %38, %41 : vector<8x32xf32>
    %c0_31 = arith.constant 0 : index
    %c0_32 = arith.constant 0 : index
    %43 = vector.load %arg6[%c0_31, %c0_32] : memref<8x32xf32, #tpu.memory_space<vmem>>, vector<8x32xf32>
    tpu.vector_store %arg6[%c0_31, %c0_32], %42 {strides = array<i32>} : memref<8x32xf32, #tpu.memory_space<vmem>>, vector<8x32xf32>,
    return
  }
  func.func @transform_0(%arg0: i32) -> (i32, i32) {
    %c0_i32 = arith.constant 0 : i32
    %c0_i32_0 = arith.constant 0 : i32
    return %arg0, %c0_i32 : i32, i32
  }
  func.func @transform_1(%arg0: i32) -> (i32, i32) {
    %c0_i32 = arith.constant 0 : i32
    %c0_i32_0 = arith.constant 0 : i32
    %c0_i32_1 = arith.constant 0 : i32
    return %c0_i32, %c0_i32_0 : i32, i32
  }
  func.func @transform_2(%arg0: i32) -> (i32, i32) {
    %c0_i32 = arith.constant 0 : i32
    %c0_i32_0 = arith.constant 0 : i32
    %c0_i32_1 = arith.constant 0 : i32
    return %c0_i32, %c0_i32_0 : i32, i32
  }
  func.func @transform_3(%arg0: i32) -> (i32, i32) {
    %c0_i32 = arith.constant 0 : i32
    %c0_i32_0 = arith.constant 0 : i32
    %c0_i32_1 = arith.constant 0 : i32
    return %c0_i32, %c0_i32_0 : i32, i32
  }
  func.func @transform_4(%arg0: i32) -> (i32, i32) {
    %c0_i32 = arith.constant 0 : i32
    %c0_i32_0 = arith.constant 0 : i32
    %c0_i32_1 = arith.constant 0 : i32
    return %c0_i32, %c0_i32_0 : i32, i32
  }
  func.func @transform_5(%arg0: i32) -> (i32, i32) {
    %c0_i32 = arith.constant 0 : i32
    %c0_i32_0 = arith.constant 0 : i32
    return %arg0, %c0_i32 : i32, i32
  }
}

module attributes {stable_mosaic.version = 11 : i64} {
  func.func @ffn_resident_kernel(%arg0: i32, %arg1: memref<8x32xf32, #tpu.memory_space<vmem>>, %arg2: memref<32x256xbf16, #tpu.memory_space<vmem>>, %arg3: memref<1x256xf32, #tpu.memory_space<vmem>>, %arg4: memref<256x32xbf16, #tpu.memory_space<vmem>>, %arg5: memref<1x32xf32, #tpu.memory_space<vmem>>, %arg6: memref<8x32xf32, #tpu.memory_space<vmem>>) attributes {dimension_semantics = [#tpu.dimension_semantics<parallel>], iteration_bounds = array<i64: 2>, scalar_prefetch = 0 : i64, scratch_operands = 0 : i64, tpu.core_type = #tpu.core_type<tc>, window_params = [{transform_indices = @transform_0, window_bounds = array<i64: 8, 32>}, {pipeline_mode = #tpu.pipeline_mode<synchronous>, transform_indices = @transform_1, window_bounds = array<i64: 32, 256>}, {pipeline_mode = #tpu.pipeline_mode<synchronous>, transform_indices = @transform_2, window_bounds = array<i64: 1, 256>}, {pipeline_mode = #tpu.pipeline_mode<synchronous>, transform_indices = @transform_3, window_bounds = array<i64: 256, 32>}, {pipeline_mode = #tpu.pipeline_mode<synchronous>, transform_indices = @transform_4, window_bounds = array<i64: 1, 32>}, {transform_indices = @transform_5, window_bounds = array<i64: 8, 32>}]} {
    %c0 = arith.constant 0 : index
    %c0_0 = arith.constant 0 : index
    %0 = vector.load %arg1[%c0, %c0_0] : memref<8x32xf32, #tpu.memory_space<vmem>>, vector<8x32xf32>
    %1 = arith.truncf %0 : vector<8x32xf32> to vector<8x32xbf16>
    %c0_1 = arith.constant 0 : index
    %c0_2 = arith.constant 0 : index
    %2 = vector.load %arg5[%c0_1, %c0_2] : memref<1x32xf32, #tpu.memory_space<vmem>>, vector<1x32xf32>
    %3 = vector.shape_cast %2 : vector<1x32xf32> to vector<1x32xf32>
    %4 = vector.broadcast %3 : vector<1x32xf32> to vector<8x32xf32>
    %c0_3 = arith.constant 0 : index
    %c0_4 = arith.constant 0 : index
    %5 = vector.load %arg6[%c0_3, %c0_4] : memref<8x32xf32, #tpu.memory_space<vmem>>, vector<8x32xf32>
    tpu.vector_store %arg6[%c0_3, %c0_4], %4 {strides = array<i32>} : memref<8x32xf32, #tpu.memory_space<vmem>>, vector<8x32xf32>,
    %c0_5 = arith.constant 0 : index
    %c0_6 = arith.constant 0 : index
    %6 = vector.load %arg2[%c0_5, %c0_6] : memref<32x256xbf16, #tpu.memory_space<vmem>>, vector<32x128xbf16>
    %cst = arith.constant dense<0.000000e+00> : vector<8x128xf32>
    %7 = tpu.matmul %1, %6, %cst {dimension_numbers = #tpu.dot_dimension_numbers<[1], [0], [0], [1], [0, 0, 1, 1], [], []>} : vector<8x32xbf16>, vector<32x128xbf16>, vector<8x128xf32> -> vector<8x128xf32>
    %c0_7 = arith.constant 0 : index
    %c0_8 = arith.constant 0 : index
    %8 = vector.load %arg3[%c0_7, %c0_8] : memref<1x256xf32, #tpu.memory_space<vmem>>, vector<1x128xf32>
    %9 = vector.broadcast %8 : vector<1x128xf32> to vector<8x128xf32>
    %10 = arith.addf %7, %9 : vector<8x128xf32>
    %cst_9 = arith.constant 5.000000e-01 : f32
    %11 = vector.broadcast %cst_9 : f32 to vector<8x128xf32>
    %12 = arith.mulf %11, %10 : vector<8x128xf32>
    %cst_10 = arith.constant 0.707106769 : f32
    %13 = vector.broadcast %cst_10 : f32 to vector<8x128xf32>
    %14 = arith.mulf %10, %13 : vector<8x128xf32>
    %15 = math.erf %14 : vector<8x128xf32>
    %cst_11 = arith.constant 1.000000e+00 : f32
    %16 = vector.broadcast %cst_11 : f32 to vector<8x128xf32>
    %17 = arith.addf %16, %15 : vector<8x128xf32>
    %18 = arith.mulf %12, %17 : vector<8x128xf32>
    %c0_12 = arith.constant 0 : index
    %c0_13 = arith.constant 0 : index
    %19 = vector.load %arg6[%c0_12, %c0_13] : memref<8x32xf32, #tpu.memory_space<vmem>>, vector<8x32xf32>
    %20 = arith.truncf %18 : vector<8x128xf32> to vector<8x128xbf16>
    %c0_14 = arith.constant 0 : index
    %c0_15 = arith.constant 0 : index
    %21 = vector.load %arg4[%c0_14, %c0_15] : memref<256x32xbf16, #tpu.memory_space<vmem>>, vector<128x32xbf16>
    %cst_16 = arith.constant dense<0.000000e+00> : vector<8x32xf32>
    %22 = tpu.matmul %20, %21, %cst_16 {dimension_numbers = #tpu.dot_dimension_numbers<[1], [0], [0], [1], [0, 0, 1, 1], [], []>} : vector<8x128xbf16>, vector<128x32xbf16>, vector<8x32xf32> -> vector<8x32xf32>
    %23 = arith.addf %19, %22 : vector<8x32xf32>
    %c0_17 = arith.constant 0 : index
    %c0_18 = arith.constant 0 : index
    %24 = vector.load %arg6[%c0_17, %c0_18] : memref<8x32xf32, #tpu.memory_space<vmem>>, vector<8x32xf32>
    tpu.vector_store %arg6[%c0_17, %c0_18], %23 {strides = array<i32>} : memref<8x32xf32, #tpu.memory_space<vmem>>, vector<8x32xf32>,
    %c0_19 = arith.constant 0 : index
    %c128 = arith.constant 128 : index
    %25 = vector.load %arg2[%c0_19, %c128] : memref<32x256xbf16, #tpu.memory_space<vmem>>, vector<32x128xbf16>
    %cst_20 = arith.constant dense<0.000000e+00> : vector<8x128xf32>
    %26 = tpu.matmul %1, %25, %cst_20 {dimension_numbers = #tpu.dot_dimension_numbers<[1], [0], [0], [1], [0, 0, 1, 1], [], []>} : vector<8x32xbf16>, vector<32x128xbf16>, vector<8x128xf32> -> vector<8x128xf32>
    %c0_21 = arith.constant 0 : index
    %c128_22 = arith.constant 128 : index
    %27 = vector.load %arg3[%c0_21, %c128_22] : memref<1x256xf32, #tpu.memory_space<vmem>>, vector<1x128xf32>
    %28 = vector.broadcast %27 : vector<1x128xf32> to vector<8x128xf32>
    %29 = arith.addf %26, %28 : vector<8x128xf32>
    %cst_23 = arith.constant 5.000000e-01 : f32
    %30 = vector.broadcast %cst_23 : f32 to vector<8x128xf32>
    %31 = arith.mulf %30, %29 : vector<8x128xf32>
    %cst_24 = arith.constant 0.707106769 : f32
    %32 = vector.broadcast %cst_24 : f32 to vector<8x128xf32>
    %33 = arith.mulf %29, %32 : vector<8x128xf32>
    %34 = math.erf %33 : vector<8x128xf32>
    %cst_25 = arith.constant 1.000000e+00 : f32
    %35 = vector.broadcast %cst_25 : f32 to vector<8x128xf32>
    %36 = arith.addf %35, %34 : vector<8x128xf32>
    %37 = arith.mulf %31, %36 : vector<8x128xf32>
    %c0_26 = arith.constant 0 : index
    %c0_27 = arith.constant 0 : index
    %38 = vector.load %arg6[%c0_26, %c0_27] : memref<8x32xf32, #tpu.memory_space<vmem>>, vector<8x32xf32>
    %39 = arith.truncf %37 : vector<8x128xf32> to vector<8x128xbf16>
    %c128_28 = arith.constant 128 : index
    %c0_29 = arith.constant 0 : index
    %40 = vector.load %arg4[%c128_28, %c0_29] : memref<256x32xbf16, #tpu.memory_space<vmem>>, vector<128x32xbf16>
    %cst_30 = arith.constant dense<0.000000e+00> : vector<8x32xf32>
    %41 = tpu.matmul %39, %40, %cst_30 {dimension_numbers = #tpu.dot_dimension_numbers<[1], [0], [0], [1], [0, 0, 1, 1], [], []>} : vector<8x128xbf16>, vector<128x32xbf16>, vector<8x32xf32> -> vector<8x32xf32>
    %42 = arith.addf %38, %41 : vector<8x32xf32>
    %c0_31 = arith.constant 0 : index
    %c0_32 = arith.constant 0 : index
    %43 = vector.load %arg6[%c0_31, %c0_32] : memref<8x32xf32, #tpu.memory_space<vmem>>, vector<8x32xf32>
    tpu.vector_store %arg6[%c0_31, %c0_32], %42 {strides = array<i32>} : memref<8x32xf32, #tpu.memory_space<vmem>>, vector<8x32xf32>,
    return
  }
  func.func @transform_0(%arg0: i32) -> (i32, i32) {
    %c0_i32 = arith.constant 0 : i32
    %c0_i32_0 = arith.constant 0 : i32
    return %arg0, %c0_i32 : i32, i32
  }
  func.func @transform_1(%arg0: i32) -> (i32, i32) {
    %c0_i32 = arith.constant 0 : i32
    %c0_i32_0 = arith.constant 0 : i32
    %c0_i32_1 = arith.constant 0 : i32
    return %c0_i32, %c0_i32_0 : i32, i32
  }
  func.func @transform_2(%arg0: i32) -> (i32, i32) {
    %c0_i32 = arith.constant 0 : i32
    %c0_i32_0 = arith.constant 0 : i32
    %c0_i32_1 = arith.constant 0 : i32
    return %c0_i32, %c0_i32_0 : i32, i32
  }
  func.func @transform_3(%arg0: i32) -> (i32, i32) {
    %c0_i32 = arith.constant 0 : i32
    %c0_i32_0 = arith.constant 0 : i32
    %c0_i32_1 = arith.constant 0 : i32
    return %c0_i32, %c0_i32_0 : i32, i32
  }
  func.func @transform_4(%arg0: i32) -> (i32, i32) {
    %c0_i32 = arith.constant 0 : i32
    %c0_i32_0 = arith.constant 0 : i32
    %c0_i32_1 = arith.constant 0 : i32
    return %c0_i32, %c0_i32_0 : i32, i32
  }
  func.func @transform_5(%arg0: i32) -> (i32, i32) {
    %c0_i32 = arith.constant 0 : i32
    %c0_i32_0 = arith.constant 0 : i32
    return %arg0, %c0_i32 : i32, i32
  }
}

</mosaic_0001>

<llo_original>
// kernel: tpu_custom_call.1
$region0: #{tpu_custom_call.1}
  #allocation0 [shape = 'u32[]', space=smem, size = 0x4, offset = 0x4, fixed_abs, tag = 'smem constant byte address 0x4 - core index']
  #allocation1 [shape = 'u32[144,128]{1,0:T(1,128)}', space=vmem, size = 0x12000, scoped, tag = 'internal scratch']
  %s0 = inlined_call_operand.vmem [shape: f32[16,32], index: 0, kind: input, shape index: {}]
  %s1 = inlined_call_operand.vmem [shape: bf16[32,256], index: 1, kind: input, shape index: {}]
  %s2 = inlined_call_operand.vmem [shape: f32[1,256], index: 2, kind: input, shape index: {}]
  %s3 = inlined_call_operand.vmem [shape: bf16[256,32], index: 3, kind: input, shape index: {}]
  %s4 = inlined_call_operand.vmem [shape: f32[1,32], index: 4, kind: input, shape index: {}]
  %s5 = inlined_call_operand.hbm [shape: f32[16,32], index: 5, kind: output, shape index: {}]
  %s6 = sld [smem:[#allocation0]]
  $region53: #{tpu_custom_call.1} parent=0
    _
  %s8 = ssub.s32 1, %s6
  %s9 = scalar_select 0, %s8, %s6
  $region1: #{tpu_custom_call.1} parent=0
    #allocation2 [shape = 'u8[8192]{0}', space=vmem, size = 0x2000, scoped, tag = 'output window, operand 0']
    #allocation3 [shape = 's32[2]{0}', space=sflag, size = 0x8, scoped, tag = 'scoped memory for tpu_custom_call.1']
    %10 = vsyncpa [#allocation3], 0
    %s11 = scalar_lea.sflag [#allocation3], 1
    %12 = vsyncpa %s11, 0
    loop: start=0, step=1, limit=4
    $region2: #{tpu_custom_call.1} parent=1 // loop_pre_header
      _
    $region3: #{tpu_custom_call.1} parent=1 // loop_header
      %s14 = sphi 0, %s18
      %p15 = scmp.ge.s32.totalorder %s14, 4
      %s24 = sphi 0, %s26
      %s27 = sphi 0, %s24
      %s28 = sphi 0, %s27
      %s44 = sphi 0, %s28
      %s48 = sphi 0, %s48
      %s50 = sphi 0, %s48
      %s51 = sphi 0, %s50
      %s65 = sphi 0, %s51
      %s69 = sphi 0, %s69
      %s71 = sphi 0, %s69
      %s72 = sphi 0, %s71
      %s86 = sphi 0, %s72
      %s90 = sphi 0, %s90
      %s92 = sphi 0, %s90
      %s93 = sphi 0, %s92
      %s107 = sphi 0, %s93
      %s111 = sphi 0, %s111
      %s113 = sphi 0, %s111
      %s114 = sphi 0, %s113
      %s128 = sphi 0, %s114
      %s134 = sphi 0, %s136
      %s137 = sphi 0, %s134
      %s138 = sphi 0, %s137
      %s154 = sphi 0, %s138
    $region4: #{tpu_custom_call.1} parent=1 // loop_header_branch
      %17 = sbr.rel (%p15) target = $region8
    $region5: #{tpu_custom_call.1} parent=1 // loop_body
      %s19 = ssub.s32 %s14, 1
      %s20 = ssub.s32 %s14, 2
      %s21 = sadd.s32 %s14, 1
      %s22 = ssub.s32 %s14, %s21
      %p23 = scmp.eq.s32.totalorder %s22, 0
      %s25 = sadd.s32 %s24, 1
      %s26 = scalar_select %p23, %s24, %s25
      %p29 = pneg %p23
      %p30 = scmp.eq.s32.totalorder %s14, 1
      %p31 = por %p29, %p30
      %p32 = scmp.ne.s32.totalorder %s24, %s27
      %p33 = scmp.eq.s32.totalorder %s14, 0
      %p34 = por %p32, %p33
      %p35 = scmp.ne.s32.totalorder %s24, %s27
      %p36 = scmp.eq.s32.totalorder %s19, 1
      %p37 = por %p35, %p36
      %p38 = scmp.ne.s32.totalorder %s27, %s28
      %p39 = scmp.eq.s32.totalorder %s19, 0
      %p40 = por %p38, %p39
      %p41 = scmp.ne.s32.totalorder %s27, %s28
      %p42 = scmp.eq.s32.totalorder %s20, 1
      %p43 = por %p41, %p42
      %p45 = scmp.ne.s32.totalorder %s28, %s44
      %p46 = scmp.eq.s32.totalorder %s20, 0
      %p47 = por %p45, %p46
      %s49 = sadd.s32 %s48, 1
      %p52 = scmp.eq.s32.totalorder %s14, 1
      %p53 = scmp.ne.s32.totalorder %s48, %s50
      %p54 = scmp.eq.s32.totalorder %s14, 0
      %p55 = por %p53, %p54
      %p56 = scmp.ne.s32.totalorder %s48, %s50
      %p57 = scmp.eq.s32.totalorder %s19, 1
      %p58 = por %p56, %p57
      %p59 = scmp.ne.s32.totalorder %s50, %s51
      %p60 = scmp.eq.s32.totalorder %s19, 0
      %p61 = por %p59, %p60
      %p62 = scmp.ne.s32.totalorder %s50, %s51
      %p63 = scmp.eq.s32.totalorder %s20, 1
      %p64 = por %p62, %p63
      %p66 = scmp.ne.s32.totalorder %s51, %s65
      %p67 = scmp.eq.s32.totalorder %s20, 0
      %p68 = por %p66, %p67
      %s70 = sadd.s32 %s69, 1
      %p73 = scmp.eq.s32.totalorder %s14, 1
      %p74 = scmp.ne.s32.totalorder %s69, %s71
      %p75 = scmp.eq.s32.totalorder %s14, 0
      %p76 = por %p74, %p75
      %p77 = scmp.ne.s32.totalorder %s69, %s71
      %p78 = scmp.eq.s32.totalorder %s19, 1
      %p79 = por %p77, %p78
      %p80 = scmp.ne.s32.totalorder %s71, %s72
      %p81 = scmp.eq.s32.totalorder %s19, 0
      %p82 = por %p80, %p81
      %p83 = scmp.ne.s32.totalorder %s71, %s72
      %p84 = scmp.eq.s32.totalorder %s20, 1
      %p85 = por %p83, %p84
      %p87 = scmp.ne.s32.totalorder %s72, %s86
      %p88 = scmp.eq.s32.totalorder %s20, 0
      %p89 = por %p87, %p88
      %s91 = sadd.s32 %s90, 1
      %p94 = scmp.eq.s32.totalorder %s14, 1
      %p95 = scmp.ne.s32.totalorder %s90, %s92
      %p96 = scmp.eq.s32.totalorder %s14, 0
      %p97 = por %p95, %p96
      %p98 = scmp.ne.s32.totalorder %s90, %s92
      %p99 = scmp.eq.s32.totalorder %s19, 1
      %p100 = por %p98, %p99
      %p101 = scmp.ne.s32.totalorder %s92, %s93
      %p102 = scmp.eq.s32.totalorder %s19, 0
      %p103 = por %p101, %p102
      %p104 = scmp.ne.s32.totalorder %s92, %s93
      %p105 = scmp.eq.s32.totalorder %s20, 1
      %p106 = por %p104, %p105
      %p108 = scmp.ne.s32.totalorder %s93, %s107
      %p109 = scmp.eq.s32.totalorder %s20, 0
      %p110 = por %p108, %p109
      %s112 = sadd.s32 %s111, 1
      %p115 = scmp.eq.s32.totalorder %s14, 1
      %p116 = scmp.ne.s32.totalorder %s111, %s113
      %p117 = scmp.eq.s32.totalorder %s14, 0
      %p118 = por %p116, %p117
      %p119 = scmp.ne.s32.totalorder %s111, %s113
      %p120 = scmp.eq.s32.totalorder %s19, 1
      %p121 = por %p119, %p120
      %p122 = scmp.ne.s32.totalorder %s113, %s114
      %p123 = scmp.eq.s32.totalorder %s19, 0
      %p124 = por %p122, %p123
      %p125 = scmp.ne.s32.totalorder %s113, %s114
      %p126 = scmp.eq.s32.totalorder %s20, 1
      %p127 = por %p125, %p126
      %p129 = scmp.ne.s32.totalorder %s114, %s128
      %p130 = scmp.eq.s32.totalorder %s20, 0
      %p131 = por %p129, %p130
      %s132 = ssub.s32 %s14, %s21
      %p133 = scmp.eq.s32.totalorder %s132, 0
      %s135 = sadd.s32 %s134, 1
      %s136 = scalar_select %p133, %s134, %s135
      %p139 = pneg %p133
      %p140 = scmp.eq.s32.totalorder %s14, 1
      %p141 = por %p139, %p140
      %p142 = scmp.ne.s32.totalorder %s134, %s137
      %p143 = scmp.eq.s32.totalorder %s14, 0
      %p144 = por %p142, %p143
      %p145 = scmp.ne.s32.totalorder %s134, %s137
      %p146 = scmp.eq.s32.totalorder %s19, 1
      %p147 = por %p145, %p146
      %p148 = scmp.ne.s32.totalorder %s137, %s138
      %p149 = scmp.eq.s32.totalorder %s19, 0
      %p150 = por %p148, %p149
      %p151 = scmp.ne.s32.totalorder %s137, %s138
      %p152 = scmp.eq.s32.totalorder %s20, 1
      %p153 = por %p151, %p152
      %p155 = scmp.ne.s32.totalorder %s138, %s154
      %p156 = scmp.eq.s32.totalorder %s20, 0
      %p157 = por %p155, %p156
      %p158 = scmp.le.s32.totalorder 1, %s14
      %p159 = scmp.lt.s32.totalorder %s14, 3
      %p160 = pnand %p158, %p159
      %p161 = pneg %p160
      // Predicated region
      $region9: #{tpu_custom_call.1} parent=5 // pred_check
        _
      $region10: #{tpu_custom_call.1} parent=5 // pred_check_branch
        %163 = sbr.rel (%p160) target = $region12
      $region11: #{tpu_custom_call.1} parent=5 // pred_region
        %s164 = ssub.s32 %s14, 1
        // Predicated region
        $region13: #{tpu_custom_call.1} parent=11 // pred_check
          %p165 = pneg %p61
        $region14: #{tpu_custom_call.1} parent=11 // pred_check_branch
          %167 = sbr.rel (%p165) target = $region16
        $region15: #{tpu_custom_call.1} parent=11 // pred_region
          _
        $region16: #{tpu_custom_call.1} parent=11 // pred_fallthru
          _
        // Predicated region
        $region17: #{tpu_custom_call.1} parent=11 // pred_check
          %p168 = pneg %p82
        $region18: #{tpu_custom_call.1} parent=11 // pred_check_branch
          %170 = sbr.rel (%p168) target = $region20
        $region19: #{tpu_custom_call.1} parent=11 // pred_region
          _
        $region20: #{tpu_custom_call.1} parent=11 // pred_fallthru
          _
        // Predicated region
        $region21: #{tpu_custom_call.1} parent=11 // pred_check
          %p171 = pneg %p103
        $region22: #{tpu_custom_call.1} parent=11 // pred_check_branch
          %173 = sbr.rel (%p171) target = $region24
        $region23: #{tpu_custom_call.1} parent=11 // pred_region
          _
        $region24: #{tpu_custom_call.1} parent=11 // pred_fallthru
          _
        // Predicated region
        $region25: #{tpu_custom_call.1} parent=11 // pred_check
          %p174 = pneg %p124
        $region26: #{tpu_custom_call.1} parent=11 // pred_check_branch
          %176 = sbr.rel (%p174) target = $region28
        $region27: #{tpu_custom_call.1} parent=11 // pred_region
          _
        $region28: #{tpu_custom_call.1} parent=11 // pred_fallthru
          _
      $region12: #{tpu_custom_call.1} parent=5 // pred_fallthru
        _
      %p177 = scmp.lt.s32.totalorder %s14, 2
      // Predicated region
      $region29: #{tpu_custom_call.1} parent=5 // pred_check
        %p178 = pneg %p177
      $region30: #{tpu_custom_call.1} parent=5 // pred_check_branch
        %180 = sbr.rel (%p178) target = $region32
      $region31: #{tpu_custom_call.1} parent=5 // pred_region
        // Predicated region
        $region33: #{tpu_custom_call.1} parent=31 // pred_check
          %p181 = pneg %p34
        $region34: #{tpu_custom_call.1} parent=31 // pred_check_branch
          %183 = sbr.rel (%p181) target = $region36
        $region35: #{tpu_custom_call.1} parent=31 // pred_region
          %p184 = scmp.lt.s32.totalorder %s14, 1
          %s185 = scalar_select %p184, %s14, 1
          %s186 = smul.addr %s185, 8
          %s187 = scalar_lea.vmem %s0, %s186
        $region36: #{tpu_custom_call.1} parent=31 // pred_fallthru
          _
      $region32: #{tpu_custom_call.1} parent=5 // pred_fallthru
        _
      %p188 = scmp.le.s32.totalorder 1, %s14
      %p189 = scmp.lt.s32.totalorder %s14, 3
      %p190 = pnand %p188, %p189
      %p191 = pneg %p190
      // Predicated region
      $region37: #{tpu_custom_call.1} parent=5 // pred_check
        _
      $region38: #{tpu_custom_call.1} parent=5 // pred_check_branch
        %193 = sbr.rel (%p190) target = $region40
      $region39: #{tpu_custom_call.1} parent=5 // pred_region
        %s194 = ssub.s32 %s14, 1
        %p195 = scmp.lt.s32.totalorder %s19, 1
        %s196 = scalar_select %p195, %s19, 1
        %s197 = smul.addr %s196, 8
        %s198 = scalar_lea.vmem %s0, %s197
        %p199 = pneg %p40
        %p200 = pneg %p37
        %p201 = pneg %p61
        %p202 = pneg %p58
        %p203 = pneg %p82
        %p204 = pneg %p79
        %p205 = pneg %p103
        %p206 = pneg %p100
        %p207 = pneg %p124
        %p208 = pneg %p121
        %p209 = pneg %p150
        %p210 = pneg %p147
        %s211 = sand.u32 %s137, 1
        %s212 = scalar_lea.sflag [#allocation3], %s211
        %s213 = sand.u32 %s137, 1
        %s214 = smul.addr %s213, 8
        %s215 = scalar_lea.vmem [#allocation2], %s214
        %p216 = scmp.lt.s32.totalorder %s19, 1
        %s217 = scalar_select %p216, %s19, 1
        %s218 = smul.addr %s217, 8
        %s219 = scalar_lea.vmem %s0, %s218
        %v221 = vld [vmem:[%s219] sm:$0xff]
        %v222 = vpack.c.bf16 %v221, %v221
        %v223 = vld [vmem:[%s4] sm:$0x1]
        %v225 = vlaneseq
        %v226 = vshrl.u32 %v225, 7
        %v227 = vsub.s32 0, %v226
        %v228 = vrot.slane %v223, %v227
        %vm230 = vcmask 261120
        %231 = vst.msk [vmem:[%s215] sm:$0xff] %vm230, %v228
        %v232 = vld [vmem:[%s1] sm:$0xf]
        %v233 = vld [vmem:[%s1 + $0x8] sm:$0xf]
        %v234 = vld [vmem:[%s1 + $0x10] sm:$0xf]
        %v235 = vld [vmem:[%s1 + $0x18] sm:$0xf]
        %v236 = vld [vmem:[%s2] sm:$0x1]
        %v238 = vlaneseq
        %v239 = vshrl.u32 %v238, 7
        %v240 = vsub.s32 0, %v239
        %v241 = vrot.slane %v236, %v240
        %v247 = vunpack.c.l.b16 %v232
        %v248 = vunpack.c.l.b16 %v233
        %v249 = vunpack.c.l.b16 %v234
        %v250 = vunpack.c.l.b16 %v235
        %v251 = vpack.c.b16 %v248, %v247
        %v252 = vpack.c.b16 %v250, %v249
        %v256 = vsel %vm230, %v222, 0
        %258 = vmatprep.subr.bf16.mxu0 0
        %259 = vmatpush1.bf16.msra.mxu0 %v251
        %260 = vmatprep.subr.bf16.mxu0 0
        %261 = vmatpush1.bf16.msra.mxu0 %v252
        %262 = vmatprep.subr.bf16.mxu0 0
        %263 = vmatpush1.bf16.msra.mxu0 0
        %264 = vmatprep.subr.bf16.mxu0 0
        %265 = vmatpush1.bf16.msra.mxu0 0
        %266 = vmatprep.subr.bf16.mxu0 0
        %267 = vmatpush1.bf16.msra.mxu0 0
        %268 = vmatprep.subr.bf16.mxu0 0
        %269 = vmatpush1.bf16.msra.mxu0 0
        %270 = vmatprep.subr.bf16.mxu0 0
        %271 = vmatpush1.bf16.msra.mxu0 0
        %272 = vmatprep.subr.bf16.mxu0 0
        %273 = vmatpush1.bf16.msra.mxu0 0
        %274 = vmatprep.subr.bf16.mxu0 0
        %275 = vmatpush1.bf16.msra.mxu0 0
        %276 = vmatprep.subr.bf16.mxu0 0
        %277 = vmatpush1.bf16.msra.mxu0 0
        %278 = vmatprep.subr.bf16.mxu0 0
        %279 = vmatpush1.bf16.msra.mxu0 0
        %280 = vmatprep.subr.bf16.mxu0 0
        %281 = vmatpush1.bf16.msra.mxu0 0
        %282 = vmatprep.subr.bf16.mxu0 0
        %283 = vmatpush1.bf16.msra.mxu0 0
        %284 = vmatprep.subr.bf16.mxu0 0
        %285 = vmatpush1.bf16.msra.mxu0 0
        %286 = vmatprep.subr.bf16.mxu0 0
        %287 = vmatpush1.bf16.msra.mxu0 0
        %288 = vmatprep.subr.bf16.mxu0 0
        %289 = vmatpush1.bf16.msra.mxu0 0
        %290 = vmatprep.mubr.bf16.mxu0 0
        %291 = vmatmul.mubr.bf16.gmra.mrb[0].mxu0 %v256
        %v292 = vpop.f32.mrb[0].mxu0
        %v293 = vadd.f32 %v241, %v292
        %v294 = vpop.f32.mrb[0].mxu0
        %v295 = vpop.f32.mrb[0].mxu0
        %v296 = vpop.f32.mrb[0].mxu0
        %297 = vdwg.mxu0
        %v298 = vmul.f32 %v293, 0.5
        %v299 = vmul.f32 %v293, 0.70710677
        %v300 = verf.f32.pop %v299
        %v301 = vadd.f32 %v300, 1.0
        %v302 = vmul.f32 %v298, %v301
        %v303 = vld [vmem:[%s215] sm:$0xff]
        %v304 = vpack.c.bf16 %v302, %v302
        %v305 = vld [vmem:[%s3] sm:$0xf]
        %v306 = vld [vmem:[%s3 + $0x4] sm:$0xf]
        %v307 = vld [vmem:[%s3 + $0x8] sm:$0xf]
        %v308 = vld [vmem:[%s3 + $0xc] sm:$0xf]
        %v309 = vld [vmem:[%s3 + $0x10] sm:$0xf]
        %v310 = vld [vmem:[%s3 + $0x14] sm:$0xf]
        %v311 = vld [vmem:[%s3 + $0x18] sm:$0xf]
        %v312 = vld [vmem:[%s3 + $0x1c] sm:$0xf]
        %v313 = vld [vmem:[%s3 + $0x20] sm:$0xf]
        %v314 = vld [vmem:[%s3 + $0x24] sm:$0xf]
        %v315 = vld [vmem:[%s3 + $0x28] sm:$0xf]
        %v316 = vld [vmem:[%s3 + $0x2c] sm:$0xf]
        %v317 = vld [vmem:[%s3 + $0x30] sm:$0xf]
        %v318 = vld [vmem:[%s3 + $0x34] sm:$0xf]
        %v319 = vld [vmem:[%s3 + $0x38] sm:$0xf]
        %v320 = vld [vmem:[%s3 + $0x3c] sm:$0xf]
        %v337 = vunpack.c.l.b16 %v305
        %v338 = vunpack.c.l.b16 %v306
        %v339 = vunpack.c.l.b16 %v307
        %v340 = vunpack.c.l.b16 %v308
        %v341 = vunpack.c.l.b16 %v309
        %v342 = vunpack.c.l.b16 %v310
        %v343 = vunpack.c.l.b16 %v311
        %v344 = vunpack.c.l.b16 %v312
        %v345 = vunpack.c.l.b16 %v313
        %v346 = vunpack.c.l.b16 %v314
        %v347 = vunpack.c.l.b16 %v315
        %v348 = vunpack.c.l.b16 %v316
        %v349 = vunpack.c.l.b16 %v317
        %v350 = vunpack.c.l.b16 %v318
        %v351 = vunpack.c.l.b16 %v319
        %v352 = vunpack.c.l.b16 %v320
        %v353 = vpack.c.b16 %v338, %v337
        %v354 = vpack.c.b16 %v340, %v339
        %v355 = vpack.c.b16 %v342, %v341
        %v356 = vpack.c.b16 %v344, %v343
        %v357 = vpack.c.b16 %v346, %v345
        %v358 = vpack.c.b16 %v348, %v347
        %v359 = vpack.c.b16 %v350, %v349
        %v360 = vpack.c.b16 %v352, %v351
        %369 = vmatprep.subr.bf16.mxu0 0
        %370 = vmatpush1.bf16.msra.mxu0 %v353
        %371 = vmatprep.subr.bf16.mxu0 0
        %372 = vmatpush1.bf16.msra.mxu0 %v354
        %373 = vmatprep.subr.bf16.mxu0 0
        %374 = vmatpush1.bf16.msra.mxu0 %v355
        %375 = vmatprep.subr.bf16.mxu0 0
        %376 = vmatpush1.bf16.msra.mxu0 %v356
        %377 = vmatprep.subr.bf16.mxu0 0
        %378 = vmatpush1.bf16.msra.mxu0 %v357
        %379 = vmatprep.subr.bf16.mxu0 0
        %380 = vmatpush1.bf16.msra.mxu0 %v358
        %381 = vmatprep.subr.bf16.mxu0 0
        %382 = vmatpush1.bf16.msra.mxu0 %v359
        %383 = vmatprep.subr.bf16.mxu0 0
        %384 = vmatpush1.bf16.msra.mxu0 %v360
        %385 = vmatprep.subr.bf16.mxu0 0
        %386 = vmatpush1.bf16.msra.mxu0 0
        %387 = vmatprep.subr.bf16.mxu0 0
        %388 = vmatpush1.bf16.msra.mxu0 0
        %389 = vmatprep.subr.bf16.mxu0 0
        %390 = vmatpush1.bf16.msra.mxu0 0
        %391 = vmatprep.subr.bf16.mxu0 0
        %392 = vmatpush1.bf16.msra.mxu0 0
        %393 = vmatprep.subr.bf16.mxu0 0
        %394 = vmatpush1.bf16.msra.mxu0 0
        %395 = vmatprep.subr.bf16.mxu0 0
        %396 = vmatpush1.bf16.msra.mxu0 0
        %397 = vmatprep.subr.bf16.mxu0 0
        %398 = vmatpush1.bf16.msra.mxu0 0
        %399 = vmatprep.subr.bf16.mxu0 0
        %400 = vmatpush1.bf16.msra.mxu0 0
        %401 = vmatprep.mubr.bf16.mxu0 0
        %402 = vmatmul.mubr.bf16.gmra.mrb[0].mxu0 %v304
        %v403 = vpop.f32.mrb[0].mxu0
        %v404 = vadd.f32 0.0, %v403
        %v405 = vpop.f32.mrb[0].mxu0
        %v406 = vpop.f32.mrb[0].mxu0
        %v407 = vpop.f32.mrb[0].mxu0
        %408 = vdwg.mxu0
        %v409 = vadd.f32 %v303, %v404
        %410 = vst.msk [vmem:[%s215] sm:$0xff] %vm230, %v409
        %v411 = vld [vmem:[%s1 + $0x4] sm:$0xf]
        %v412 = vld [vmem:[%s1 + $0xc] sm:$0xf]
        %v413 = vld [vmem:[%s1 + $0x14] sm:$0xf]
        %v414 = vld [vmem:[%s1 + $0x1c] sm:$0xf]
        %v415 = vld [vmem:[%s2 + $0x1] sm:$0x1]
        %v417 = vlaneseq
        %v418 = vshrl.u32 %v417, 7
        %v419 = vsub.s32 0, %v418
        %v420 = vrot.slane %v415, %v419
        %v426 = vunpack.c.l.b16 %v411
        %v427 = vunpack.c.l.b16 %v412
        %v428 = vunpack.c.l.b16 %v413
        %v429 = vunpack.c.l.b16 %v414
        %v430 = vpack.c.b16 %v427, %v426
        %v431 = vpack.c.b16 %v429, %v428
        %434 = vmatprep.subr.bf16.mxu0 0
        %435 = vmatpush1.bf16.msra.mxu0 %v430
        %436 = vmatprep.subr.bf16.mxu0 0
        %437 = vmatpush1.bf16.msra.mxu0 %v431
        %438 = vmatprep.subr.bf16.mxu0 0
        %439 = vmatpush1.bf16.msra.mxu0 0
        %440 = vmatprep.subr.bf16.mxu0 0
        %441 = vmatpush1.bf16.msra.mxu0 0
        %442 = vmatprep.subr.bf16.mxu0 0
        %443 = vmatpush1.bf16.msra.mxu0 0
        %444 = vmatprep.subr.bf16.mxu0 0
        %445 = vmatpush1.bf16.msra.mxu0 0
        %446 = vmatprep.subr.bf16.mxu0 0
        %447 = vmatpush1.bf16.msra.mxu0 0
        %448 = vmatprep.subr.bf16.mxu0 0
        %449 = vmatpush1.bf16.msra.mxu0 0
        %450 = vmatprep.subr.bf16.mxu0 0
        %451 = vmatpush1.bf16.msra.mxu0 0
        %452 = vmatprep.subr.bf16.mxu0 0
        %453 = vmatpush1.bf16.msra.mxu0 0
        %454 = vmatprep.subr.bf16.mxu0 0
        %455 = vmatpush1.bf16.msra.mxu0 0
        %456 = vmatprep.subr.bf16.mxu0 0
        %457 = vmatpush1.bf16.msra.mxu0 0
        %458 = vmatprep.subr.bf16.mxu0 0
        %459 = vmatpush1.bf16.msra.mxu0 0
        %460 = vmatprep.subr.bf16.mxu0 0
        %461 = vmatpush1.bf16.msra.mxu0 0
        %462 = vmatprep.subr.bf16.mxu0 0
        %463 = vmatpush1.bf16.msra.mxu0 0
        %464 = vmatprep.subr.bf16.mxu0 0
        %465 = vmatpush1.bf16.msra.mxu0 0
        %466 = vmatprep.mubr.bf16.mxu0 0
        %467 = vmatmul.mubr.bf16.gmra.mrb[0].mxu0 %v256
        %v468 = vpop.f32.mrb[0].mxu0
        %v469 = vadd.f32 %v420, %v468
        %v470 = vpop.f32.mrb[0].mxu0
        %v471 = vpop.f32.mrb[0].mxu0
        %v472 = vpop.f32.mrb[0].mxu0
        %473 = vdwg.mxu0
        %v474 = vmul.f32 %v469, 0.5
        %v475 = vmul.f32 %v469, 0.70710677
        %v476 = verf.f32.pop %v475
        %v477 = vadd.f32 %v476, 1.0
        %v478 = vmul.f32 %v474, %v477
        %v479 = vld [vmem:[%s215] sm:$0xff]
        %v480 = vpack.c.bf16 %v478, %v478
        %v481 = vld [vmem:[%s3 + $0x40] sm:$0xf]
        %v482 = vld [vmem:[%s3 + $0x44] sm:$0xf]
        %v483 = vld [vmem:[%s3 + $0x48] sm:$0xf]
        %v484 = vld [vmem:[%s3 + $0x4c] sm:$0xf]
        %v485 = vld [vmem:[%s3 + $0x50] sm:$0xf]
        %v486 = vld [vmem:[%s3 + $0x54] sm:$0xf]
        %v487 = vld [vmem:[%s3 + $0x58] sm:$0xf]
        %v488 = vld [vmem:[%s3 + $0x5c] sm:$0xf]
        %v489 = vld [vmem:[%s3 + $0x60] sm:$0xf]
        %v490 = vld [vmem:[%s3 + $0x64] sm:$0xf]
        %v491 = vld [vmem:[%s3 + $0x68] sm:$0xf]
        %v492 = vld [vmem:[%s3 + $0x6c] sm:$0xf]
        %v493 = vld [vmem:[%s3 + $0x70] sm:$0xf]
        %v494 = vld [vmem:[%s3 + $0x74] sm:$0xf]
        %v495 = vld [vmem:[%s3 + $0x78] sm:$0xf]
        %v496 = vld [vmem:[%s3 + $0x7c] sm:$0xf]
        %v513 = vunpack.c.l.b16 %v481
        %v514 = vunpack.c.l.b16 %v482
        %v515 = vunpack.c.l.b16 %v483
        %v516 = vunpack.c.l.b16 %v484
        %v517 = vunpack.c.l.b16 %v485
        %v518 = vunpack.c.l.b16 %v486
        %v519 = vunpack.c.l.b16 %v487
        %v520 = vunpack.c.l.b16 %v488
        %v521 = vunpack.c.l.b16 %v489
        %v522 = vunpack.c.l.b16 %v490
        %v523 = vunpack.c.l.b16 %v491
        %v524 = vunpack.c.l.b16 %v492
        %v525 = vunpack.c.l.b16 %v493
        %v526 = vunpack.c.l.b16 %v494
        %v527 = vunpack.c.l.b16 %v495
        %v528 = vunpack.c.l.b16 %v496
        %v529 = vpack.c.b16 %v514, %v513
        %v530 = vpack.c.b16 %v516, %v515
        %v531 = vpack.c.b16 %v518, %v517
        %v532 = vpack.c.b16 %v520, %v519
        %v533 = vpack.c.b16 %v522, %v521
        %v534 = vpack.c.b16 %v524, %v523
        %v535 = vpack.c.b16 %v526, %v525
        %v536 = vpack.c.b16 %v528, %v527
        %545 = vmatprep.subr.bf16.mxu0 0
        %546 = vmatpush1.bf16.msra.mxu0 %v529
        %547 = vmatprep.subr.bf16.mxu0 0
        %548 = vmatpush1.bf16.msra.mxu0 %v530
        %549 = vmatprep.subr.bf16.mxu0 0
        %550 = vmatpush1.bf16.msra.mxu0 %v531
        %551 = vmatprep.subr.bf16.mxu0 0
        %552 = vmatpush1.bf16.msra.mxu0 %v532
        %553 = vmatprep.subr.bf16.mxu0 0
        %554 = vmatpush1.bf16.msra.mxu0 %v533
        %555 = vmatprep.subr.bf16.mxu0 0
        %556 = vmatpush1.bf16.msra.mxu0 %v534
        %557 = vmatprep.subr.bf16.mxu0 0
        %558 = vmatpush1.bf16.msra.mxu0 %v535
        %559 = vmatprep.subr.bf16.mxu0 0
        %560 = vmatpush1.bf16.msra.mxu0 %v536
        %561 = vmatprep.subr.bf16.mxu0 0
        %562 = vmatpush1.bf16.msra.mxu0 0
        %563 = vmatprep.subr.bf16.mxu0 0
        %564 = vmatpush1.bf16.msra.mxu0 0
        %565 = vmatprep.subr.bf16.mxu0 0
        %566 = vmatpush1.bf16.msra.mxu0 0
        %567 = vmatprep.subr.bf16.mxu0 0
        %568 = vmatpush1.bf16.msra.mxu0 0
        %569 = vmatprep.subr.bf16.mxu0 0
        %570 = vmatpush1.bf16.msra.mxu0 0
        %571 = vmatprep.subr.bf16.mxu0 0
        %572 = vmatpush1.bf16.msra.mxu0 0
        %573 = vmatprep.subr.bf16.mxu0 0
        %574 = vmatpush1.bf16.msra.mxu0 0
        %575 = vmatprep.subr.bf16.mxu0 0
        %576 = vmatpush1.bf16.msra.mxu0 0
        %577 = vmatprep.mubr.bf16.mxu0 0
        %578 = vmatmul.mubr.bf16.gmra.mrb[0].mxu0 %v480
        %v579 = vpop.f32.mrb[0].mxu0
        %v580 = vadd.f32 0.0, %v579
        %v581 = vpop.f32.mrb[0].mxu0
        %v582 = vpop.f32.mrb[0].mxu0
        %v583 = vpop.f32.mrb[0].mxu0
        %584 = vdwg.mxu0
        %v585 = vadd.f32 %v479, %v580
        %586 = vst.msk [vmem:[%s215] sm:$0xff] %vm230, %v585
        %s587 = sand.u32 %s137, 1
        %s588 = scalar_lea.sflag [#allocation3], %s587
        %s589 = sand.u32 %s137, 1
        %s590 = smul.addr %s589, 8
        %s591 = scalar_lea.vmem [#allocation2], %s590
        // Predicated region
        $region41: #{tpu_custom_call.1} parent=39 // pred_check
          %p592 = pneg %p147
        $region42: #{tpu_custom_call.1} parent=39 // pred_check_branch
          %594 = sbr.rel (%p592) target = $region44
        $region43: #{tpu_custom_call.1} parent=39 // pred_region
          %s596 = ssub.s32 128, 128
          %597 = vsyncadd %s588, %s596
          %s598 = smul.addr %s19, 128
          %s599 = scalar_lea.hbm %s5, %s598
          %s601 = sshll.u32 %s591, 4
          %s602 = int_to_ptr.vmem [resolvable:$true] %s601
          %604 = dma.vmem_to_hbm [thread:$0]  %s602, 128, %s599, %s588
        $region44: #{tpu_custom_call.1} parent=39 // pred_fallthru
          _
      $region40: #{tpu_custom_call.1} parent=5 // pred_fallthru
        _
      %p605 = scmp.le.s32.totalorder 2, %s14
      // Predicated region
      $region45: #{tpu_custom_call.1} parent=5 // pred_check
        %p606 = pneg %p605
      $region46: #{tpu_custom_call.1} parent=5 // pred_check_branch
        %608 = sbr.rel (%p606) target = $region48
      $region47: #{tpu_custom_call.1} parent=5 // pred_region
        %s609 = ssub.s32 %s14, 2
        // Predicated region
        $region49: #{tpu_custom_call.1} parent=47 // pred_check
          %p610 = pneg %p153
        $region50: #{tpu_custom_call.1} parent=47 // pred_check_branch
          %612 = sbr.rel (%p610) target = $region52
        $region51: #{tpu_custom_call.1} parent=47 // pred_region
          %s613 = sand.u32 %s138, 1
          %s614 = scalar_lea.sflag [#allocation3], %s613
          %s615 = sand.u32 %s138, 1
          %s616 = smul.addr %s615, 8
          %s617 = scalar_lea.vmem [#allocation2], %s616
          %618 = dma.done %s614, 128
        $region52: #{tpu_custom_call.1} parent=47 // pred_fallthru
          _
      $region48: #{tpu_custom_call.1} parent=5 // pred_fallthru
        _
    $region6: #{tpu_custom_call.1} parent=1 // loop_footer
      %s18 = sadd.s32 1, %s14
    $region7: #{tpu_custom_call.1} parent=1 // loop_footer_branch
      %13 = sbr.rel target = $region3
    $region8: #{tpu_custom_call.1} parent=1 // loop_exit
      _
    %619 = vsyncpa [#allocation3], 1
    %s620 = scalar_lea.sflag [#allocation3], 1
    %621 = vsyncpa %s620, 1

// kernel: tpu_custom_call.1
$region0: #{tpu_custom_call.1}
  #allocation0 [shape = 'u32[]', space=smem, size = 0x4, offset = 0x4, fixed_abs, tag = 'smem constant byte address 0x4 - core index']
  #allocation1 [shape = 'u32[144,128]{1,0:T(1,128)}', space=vmem, size = 0x12000, scoped, tag = 'internal scratch']
  %s0 = inlined_call_operand.vmem [shape: f32[16,32], index: 0, kind: input, shape index: {}]
  %s1 = inlined_call_operand.vmem [shape: bf16[32,256], index: 1, kind: input, shape index: {}]
  %s2 = inlined_call_operand.vmem [shape: f32[1,256], index: 2, kind: input, shape index: {}]
  %s3 = inlined_call_operand.vmem [shape: bf16[256,32], index: 3, kind: input, shape index: {}]
  %s4 = inlined_call_operand.vmem [shape: f32[1,32], index: 4, kind: input, shape index: {}]
  %s5 = inlined_call_operand.hbm [shape: f32[16,32], index: 5, kind: output, shape index: {}]
  %s6 = sld [smem:[#allocation0]]
  $region53: #{tpu_custom_call.1} parent=0
    _
  %s8 = ssub.s32 1, %s6
  %s9 = scalar_select 0, %s8, %s6
  $region1: #{tpu_custom_call.1} parent=0
    #allocation2 [shape = 'u8[8192]{0}', space=vmem, size = 0x2000, scoped, tag = 'output window, operand 0']
    #allocation3 [shape = 's32[2]{0}', space=sflag, size = 0x8, scoped, tag = 'scoped memory for tpu_custom_call.1']
    %10 = vsyncpa [#allocation3], 0
    %s11 = scalar_lea.sflag [#allocation3], 1
    %12 = vsyncpa %s11, 0
    loop: start=0, step=1, limit=4
    $region2: #{tpu_custom_call.1} parent=1 // loop_pre_header
      _
    $region3: #{tpu_custom_call.1} parent=1 // loop_header
      %s14 = sphi 0, %s18
      %p15 = scmp.ge.s32.totalorder %s14, 4
      %s24 = sphi 0, %s26
      %s27 = sphi 0, %s24
      %s28 = sphi 0, %s27
      %s44 = sphi 0, %s28
      %s48 = sphi 0, %s48
      %s50 = sphi 0, %s48
      %s51 = sphi 0, %s50
      %s65 = sphi 0, %s51
      %s69 = sphi 0, %s69
      %s71 = sphi 0, %s69
      %s72 = sphi 0, %s71
      %s86 = sphi 0, %s72
      %s90 = sphi 0, %s90
      %s92 = sphi 0, %s90
      %s93 = sphi 0, %s92
      %s107 = sphi 0, %s93
      %s111 = sphi 0, %s111
      %s113 = sphi 0, %s111
      %s114 = sphi 0, %s113
      %s128 = sphi 0, %s114
      %s134 = sphi 0, %s136
      %s137 = sphi 0, %s134
      %s138 = sphi 0, %s137
      %s154 = sphi 0, %s138
    $region4: #{tpu_custom_call.1} parent=1 // loop_header_branch
      %17 = sbr.rel (%p15) target = $region8
    $region5: #{tpu_custom_call.1} parent=1 // loop_body
      %s19 = ssub.s32 %s14, 1
      %s20 = ssub.s32 %s14, 2
      %s21 = sadd.s32 %s14, 1
      %s22 = ssub.s32 %s14, %s21
      %p23 = scmp.eq.s32.totalorder %s22, 0
      %s25 = sadd.s32 %s24, 1
      %s26 = scalar_select %p23, %s24, %s25
      %p29 = pneg %p23
      %p30 = scmp.eq.s32.totalorder %s14, 1
      %p31 = por %p29, %p30
      %p32 = scmp.ne.s32.totalorder %s24, %s27
      %p33 = scmp.eq.s32.totalorder %s14, 0
      %p34 = por %p32, %p33
      %p35 = scmp.ne.s32.totalorder %s24, %s27
      %p36 = scmp.eq.s32.totalorder %s19, 1
      %p37 = por %p35, %p36
      %p38 = scmp.ne.s32.totalorder %s27, %s28
      %p39 = scmp.eq.s32.totalorder %s19, 0
      %p40 = por %p38, %p39
      %p41 = scmp.ne.s32.totalorder %s27, %s28
      %p42 = scmp.eq.s32.totalorder %s20, 1
      %p43 = por %p41, %p42
      %p45 = scmp.ne.s32.totalorder %s28, %s44
      %p46 = scmp.eq.s32.totalorder %s20, 0
      %p47 = por %p45, %p46
      %s49 = sadd.s32 %s48, 1
      %p52 = scmp.eq.s32.totalorder %s14, 1
      %p53 = scmp.ne.s32.totalorder %s48, %s50
      %p54 = scmp.eq.s32.totalorder %s14, 0
      %p55 = por %p53, %p54
      %p56 = scmp.ne.s32.totalorder %s48, %s50
      %p57 = scmp.eq.s32.totalorder %s19, 1
      %p58 = por %p56, %p57
      %p59 = scmp.ne.s32.totalorder %s50, %s51
      %p60 = scmp.eq.s32.totalorder %s19, 0
      %p61 = por %p59, %p60
      %p62 = scmp.ne.s32.totalorder %s50, %s51
      %p63 = scmp.eq.s32.totalorder %s20, 1
      %p64 = por %p62, %p63
      %p66 = scmp.ne.s32.totalorder %s51, %s65
      %p67 = scmp.eq.s32.totalorder %s20, 0
      %p68 = por %p66, %p67
      %s70 = sadd.s32 %s69, 1
      %p73 = scmp.eq.s32.totalorder %s14, 1
      %p74 = scmp.ne.s32.totalorder %s69, %s71
      %p75 = scmp.eq.s32.totalorder %s14, 0
      %p76 = por %p74, %p75
      %p77 = scmp.ne.s32.totalorder %s69, %s71
      %p78 = scmp.eq.s32.totalorder %s19, 1
      %p79 = por %p77, %p78
      %p80 = scmp.ne.s32.totalorder %s71, %s72
      %p81 = scmp.eq.s32.totalorder %s19, 0
      %p82 = por %p80, %p81
      %p83 = scmp.ne.s32.totalorder %s71, %s72
      %p84 = scmp.eq.s32.totalorder %s20, 1
      %p85 = por %p83, %p84
      %p87 = scmp.ne.s32.totalorder %s72, %s86
      %p88 = scmp.eq.s32.totalorder %s20, 0
      %p89 = por %p87, %p88
      %s91 = sadd.s32 %s90, 1
      %p94 = scmp.eq.s32.totalorder %s14, 1
      %p95 = scmp.ne.s32.totalorder %s90, %s92
      %p96 = scmp.eq.s32.totalorder %s14, 0
      %p97 = por %p95, %p96
      %p98 = scmp.ne.s32.totalorder %s90, %s92
      %p99 = scmp.eq.s32.totalorder %s19, 1
      %p100 = por %p98, %p99
      %p101 = scmp.ne.s32.totalorder %s92, %s93
      %p102 = scmp.eq.s32.totalorder %s19, 0
      %p103 = por %p101, %p102
      %p104 = scmp.ne.s32.totalorder %s92, %s93
      %p105 = scmp.eq.s32.totalorder %s20, 1
      %p106 = por %p104, %p105
      %p108 = scmp.ne.s32.totalorder %s93, %s107
      %p109 = scmp.eq.s32.totalorder %s20, 0
      %p110 = por %p108, %p109
      %s112 = sadd.s32 %s111, 1
      %p115 = scmp.eq.s32.totalorder %s14, 1
      %p116 = scmp.ne.s32.totalorder %s111, %s113
      %p117 = scmp.eq.s32.totalorder %s14, 0
      %p118 = por %p116, %p117
      %p119 = scmp.ne.s32.totalorder %s111, %s113
      %p120 = scmp.eq.s32.totalorder %s19, 1
      %p121 = por %p119, %p120
      %p122 = scmp.ne.s32.totalorder %s113, %s114
      %p123 = scmp.eq.s32.totalorder %s19, 0
      %p124 = por %p122, %p123
      %p125 = scmp.ne.s32.totalorder %s113, %s114
      %p126 = scmp.eq.s32.totalorder %s20, 1
      %p127 = por %p125, %p126
      %p129 = scmp.ne.s32.totalorder %s114, %s128
      %p130 = scmp.eq.s32.totalorder %s20, 0
      %p131 = por %p129, %p130
      %s132 = ssub.s32 %s14, %s21
      %p133 = scmp.eq.s32.totalorder %s132, 0
      %s135 = sadd.s32 %s134, 1
      %s136 = scalar_select %p133, %s134, %s135
      %p139 = pneg %p133
      %p140 = scmp.eq.s32.totalorder %s14, 1
      %p141 = por %p139, %p140
      %p142 = scmp.ne.s32.totalorder %s134, %s137
      %p143 = scmp.eq.s32.totalorder %s14, 0
      %p144 = por %p142, %p143
      %p145 = scmp.ne.s32.totalorder %s134, %s137
      %p146 = scmp.eq.s32.totalorder %s19, 1
      %p147 = por %p145, %p146
      %p148 = scmp.ne.s32.totalorder %s137, %s138
      %p149 = scmp.eq.s32.totalorder %s19, 0
      %p150 = por %p148, %p149
      %p151 = scmp.ne.s32.totalorder %s137, %s138
      %p152 = scmp.eq.s32.totalorder %s20, 1
      %p153 = por %p151, %p152
      %p155 = scmp.ne.s32.totalorder %s138, %s154
      %p156 = scmp.eq.s32.totalorder %s20, 0
      %p157 = por %p155, %p156
      %p158 = scmp.le.s32.totalorder 1, %s14
      %p159 = scmp.lt.s32.totalorder %s14, 3
      %p160 = pnand %p158, %p159
      %p161 = pneg %p160
      // Predicated region
      $region9: #{tpu_custom_call.1} parent=5 // pred_check
        _
      $region10: #{tpu_custom_call.1} parent=5 // pred_check_branch
        %163 = sbr.rel (%p160) target = $region12
      $region11: #{tpu_custom_call.1} parent=5 // pred_region
        %s164 = ssub.s32 %s14, 1
        // Predicated region
        $region13: #{tpu_custom_call.1} parent=11 // pred_check
          %p165 = pneg %p61
        $region14: #{tpu_custom_call.1} parent=11 // pred_check_branch
          %167 = sbr.rel (%p165) target = $region16
        $region15: #{tpu_custom_call.1} parent=11 // pred_region
          _
        $region16: #{tpu_custom_call.1} parent=11 // pred_fallthru
          _
        // Predicated region
        $region17: #{tpu_custom_call.1} parent=11 // pred_check
          %p168 = pneg %p82
        $region18: #{tpu_custom_call.1} parent=11 // pred_check_branch
          %170 = sbr.rel (%p168) target = $region20
        $region19: #{tpu_custom_call.1} parent=11 // pred_region
          _
        $region20: #{tpu_custom_call.1} parent=11 // pred_fallthru
          _
        // Predicated region
        $region21: #{tpu_custom_call.1} parent=11 // pred_check
          %p171 = pneg %p103
        $region22: #{tpu_custom_call.1} parent=11 // pred_check_branch
          %173 = sbr.rel (%p171) target = $region24
        $region23: #{tpu_custom_call.1} parent=11 // pred_region
          _
        $region24: #{tpu_custom_call.1} parent=11 // pred_fallthru
          _
        // Predicated region
        $region25: #{tpu_custom_call.1} parent=11 // pred_check
          %p174 = pneg %p124
        $region26: #{tpu_custom_call.1} parent=11 // pred_check_branch
          %176 = sbr.rel (%p174) target = $region28
        $region27: #{tpu_custom_call.1} parent=11 // pred_region
          _
        $region28: #{tpu_custom_call.1} parent=11 // pred_fallthru
          _
      $region12: #{tpu_custom_call.1} parent=5 // pred_fallthru
        _
      %p177 = scmp.lt.s32.totalorder %s14, 2
      // Predicated region
      $region29: #{tpu_custom_call.1} parent=5 // pred_check
        %p178 = pneg %p177
      $region30: #{tpu_custom_call.1} parent=5 // pred_check_branch
        %180 = sbr.rel (%p178) target = $region32
      $region31: #{tpu_custom_call.1} parent=5 // pred_region
        // Predicated region
        $region33: #{tpu_custom_call.1} parent=31 // pred_check
          %p181 = pneg %p34
        $region34: #{tpu_custom_call.1} parent=31 // pred_check_branch
          %183 = sbr.rel (%p181) target = $region36
        $region35: #{tpu_custom_call.1} parent=31 // pred_region
          %p184 = scmp.lt.s32.totalorder %s14, 1
          %s185 = scalar_select %p184, %s14, 1
          %s186 = smul.addr %s185, 8
          %s187 = scalar_lea.vmem %s0, %s186
        $region36: #{tpu_custom_call.1} parent=31 // pred_fallthru
          _
      $region32: #{tpu_custom_call.1} parent=5 // pred_fallthru
        _
      %p188 = scmp.le.s32.totalorder 1, %s14
      %p189 = scmp.lt.s32.totalorder %s14, 3
      %p190 = pnand %p188, %p189
      %p191 = pneg %p190
      // Predicated region
      $region37: #{tpu_custom_call.1} parent=5 // pred_check
        _
      $region38: #{tpu_custom_call.1} parent=5 // pred_check_branch
        %193 = sbr.rel (%p190) target = $region40
      $region39: #{tpu_custom_call.1} parent=5 // pred_region
        %s194 = ssub.s32 %s14, 1
        %p195 = scmp.lt.s32.totalorder %s19, 1
        %s196 = scalar_select %p195, %s19, 1
        %s197 = smul.addr %s196, 8
        %s198 = scalar_lea.vmem %s0, %s197
        %p199 = pneg %p40
        %p200 = pneg %p37
        %p201 = pneg %p61
        %p202 = pneg %p58
        %p203 = pneg %p82
        %p204 = pneg %p79
        %p205 = pneg %p103
        %p206 = pneg %p100
        %p207 = pneg %p124
        %p208 = pneg %p121
        %p209 = pneg %p150
        %p210 = pneg %p147
        %s211 = sand.u32 %s137, 1
        %s212 = scalar_lea.sflag [#allocation3], %s211
        %s213 = sand.u32 %s137, 1
        %s214 = smul.addr %s213, 8
        %s215 = scalar_lea.vmem [#allocation2], %s214
        %p216 = scmp.lt.s32.totalorder %s19, 1
        %s217 = scalar_select %p216, %s19, 1
        %s218 = smul.addr %s217, 8
        %s219 = scalar_lea.vmem %s0, %s218
        %v221 = vld [vmem:[%s219] sm:$0xff]
        %v222 = vpack.c.bf16 %v221, %v221
        %v223 = vld [vmem:[%s4] sm:$0x1]
        %v225 = vlaneseq
        %v226 = vshrl.u32 %v225, 7
        %v227 = vsub.s32 0, %v226
        %v228 = vrot.slane %v223, %v227
        %vm230 = vcmask 261120
        %231 = vst.msk [vmem:[%s215] sm:$0xff] %vm230, %v228
        %v232 = vld [vmem:[%s1] sm:$0xf]
        %v233 = vld [vmem:[%s1 + $0x8] sm:$0xf]
        %v234 = vld [vmem:[%s1 + $0x10] sm:$0xf]
        %v235 = vld [vmem:[%s1 + $0x18] sm:$0xf]
        %v236 = vld [vmem:[%s2] sm:$0x1]
        %v238 = vlaneseq
        %v239 = vshrl.u32 %v238, 7
        %v240 = vsub.s32 0, %v239
        %v241 = vrot.slane %v236, %v240
        %v247 = vunpack.c.l.b16 %v232
        %v248 = vunpack.c.l.b16 %v233
        %v249 = vunpack.c.l.b16 %v234
        %v250 = vunpack.c.l.b16 %v235
        %v251 = vpack.c.b16 %v248, %v247
        %v252 = vpack.c.b16 %v250, %v249
        %v256 = vsel %vm230, %v222, 0
        %258 = vmatprep.subr.bf16.mxu0 0
        %259 = vmatpush1.bf16.msra.mxu0 %v251
        %260 = vmatprep.subr.bf16.mxu0 0
        %261 = vmatpush1.bf16.msra.mxu0 %v252
        %262 = vmatprep.subr.bf16.mxu0 0
        %263 = vmatpush1.bf16.msra.mxu0 0
        %264 = vmatprep.subr.bf16.mxu0 0
        %265 = vmatpush1.bf16.msra.mxu0 0
        %266 = vmatprep.subr.bf16.mxu0 0
        %267 = vmatpush1.bf16.msra.mxu0 0
        %268 = vmatprep.subr.bf16.mxu0 0
        %269 = vmatpush1.bf16.msra.mxu0 0
        %270 = vmatprep.subr.bf16.mxu0 0
        %271 = vmatpush1.bf16.msra.mxu0 0
        %272 = vmatprep.subr.bf16.mxu0 0
        %273 = vmatpush1.bf16.msra.mxu0 0
        %274 = vmatprep.subr.bf16.mxu0 0
        %275 = vmatpush1.bf16.msra.mxu0 0
        %276 = vmatprep.subr.bf16.mxu0 0
        %277 = vmatpush1.bf16.msra.mxu0 0
        %278 = vmatprep.subr.bf16.mxu0 0
        %279 = vmatpush1.bf16.msra.mxu0 0
        %280 = vmatprep.subr.bf16.mxu0 0
        %281 = vmatpush1.bf16.msra.mxu0 0
        %282 = vmatprep.subr.bf16.mxu0 0
        %283 = vmatpush1.bf16.msra.mxu0 0
        %284 = vmatprep.subr.bf16.mxu0 0
        %285 = vmatpush1.bf16.msra.mxu0 0
        %286 = vmatprep.subr.bf16.mxu0 0
        %287 = vmatpush1.bf16.msra.mxu0 0
        %288 = vmatprep.subr.bf16.mxu0 0
        %289 = vmatpush1.bf16.msra.mxu0 0
        %290 = vmatprep.mubr.bf16.mxu0 0
        %291 = vmatmul.mubr.bf16.gmra.mrb[0].mxu0 %v256
        %v292 = vpop.f32.mrb[0].mxu0
        %v293 = vadd.f32 %v241, %v292
        %v294 = vpop.f32.mrb[0].mxu0
        %v295 = vpop.f32.mrb[0].mxu0
        %v296 = vpop.f32.mrb[0].mxu0
        %297 = vdwg.mxu0
        %v298 = vmul.f32 %v293, 0.5
        %v299 = vmul.f32 %v293, 0.70710677
        %v300 = verf.f32.pop %v299
        %v301 = vadd.f32 %v300, 1.0
        %v302 = vmul.f32 %v298, %v301
        %v303 = vld [vmem:[%s215] sm:$0xff]
        %v304 = vpack.c.bf16 %v302, %v302
        %v305 = vld [vmem:[%s3] sm:$0xf]
        %v306 = vld [vmem:[%s3 + $0x4] sm:$0xf]
        %v307 = vld [vmem:[%s3 + $0x8] sm:$0xf]
        %v308 = vld [vmem:[%s3 + $0xc] sm:$0xf]
        %v309 = vld [vmem:[%s3 + $0x10] sm:$0xf]
        %v310 = vld [vmem:[%s3 + $0x14] sm:$0xf]
        %v311 = vld [vmem:[%s3 + $0x18] sm:$0xf]
        %v312 = vld [vmem:[%s3 + $0x1c] sm:$0xf]
        %v313 = vld [vmem:[%s3 + $0x20] sm:$0xf]
        %v314 = vld [vmem:[%s3 + $0x24] sm:$0xf]
        %v315 = vld [vmem:[%s3 + $0x28] sm:$0xf]
        %v316 = vld [vmem:[%s3 + $0x2c] sm:$0xf]
        %v317 = vld [vmem:[%s3 + $0x30] sm:$0xf]
        %v318 = vld [vmem:[%s3 + $0x34] sm:$0xf]
        %v319 = vld [vmem:[%s3 + $0x38] sm:$0xf]
        %v320 = vld [vmem:[%s3 + $0x3c] sm:$0xf]
        %v337 = vunpack.c.l.b16 %v305
        %v338 = vunpack.c.l.b16 %v306
        %v339 = vunpack.c.l.b16 %v307
        %v340 = vunpack.c.l.b16 %v308
        %v341 = vunpack.c.l.b16 %v309
        %v342 = vunpack.c.l.b16 %v310
        %v343 = vunpack.c.l.b16 %v311
        %v344 = vunpack.c.l.b16 %v312
        %v345 = vunpack.c.l.b16 %v313
        %v346 = vunpack.c.l.b16 %v314
        %v347 = vunpack.c.l.b16 %v315
        %v348 = vunpack.c.l.b16 %v316
        %v349 = vunpack.c.l.b16 %v317
        %v350 = vunpack.c.l.b16 %v318
        %v351 = vunpack.c.l.b16 %v319
        %v352 = vunpack.c.l.b16 %v320
        %v353 = vpack.c.b16 %v338, %v337
        %v354 = vpack.c.b16 %v340, %v339
        %v355 = vpack.c.b16 %v342, %v341
        %v356 = vpack.c.b16 %v344, %v343
        %v357 = vpack.c.b16 %v346, %v345
        %v358 = vpack.c.b16 %v348, %v347
        %v359 = vpack.c.b16 %v350, %v349
        %v360 = vpack.c.b16 %v352, %v351
        %369 = vmatprep.subr.bf16.mxu0 0
        %370 = vmatpush1.bf16.msra.mxu0 %v353
        %371 = vmatprep.subr.bf16.mxu0 0
        %372 = vmatpush1.bf16.msra.mxu0 %v354
        %373 = vmatprep.subr.bf16.mxu0 0
        %374 = vmatpush1.bf16.msra.mxu0 %v355
        %375 = vmatprep.subr.bf16.mxu0 0
        %376 = vmatpush1.bf16.msra.mxu0 %v356
        %377 = vmatprep.subr.bf16.mxu0 0
        %378 = vmatpush1.bf16.msra.mxu0 %v357
        %379 = vmatprep.subr.bf16.mxu0 0
        %380 = vmatpush1.bf16.msra.mxu0 %v358
        %381 = vmatprep.subr.bf16.mxu0 0
        %382 = vmatpush1.bf16.msra.mxu0 %v359
        %383 = vmatprep.subr.bf16.mxu0 0
        %384 = vmatpush1.bf16.msra.mxu0 %v360
        %385 = vmatprep.subr.bf16.mxu0 0
        %386 = vmatpush1.bf16.msra.mxu0 0
        %387 = vmatprep.subr.bf16.mxu0 0
        %388 = vmatpush1.bf16.msra.mxu0 0
        %389 = vmatprep.subr.bf16.mxu0 0
        %390 = vmatpush1.bf16.msra.mxu0 0
        %391 = vmatprep.subr.bf16.mxu0 0
        %392 = vmatpush1.bf16.msra.mxu0 0
        %393 = vmatprep.subr.bf16.mxu0 0
        %394 = vmatpush1.bf16.msra.mxu0 0
        %395 = vmatprep.subr.bf16.mxu0 0
        %396 = vmatpush1.bf16.msra.mxu0 0
        %397 = vmatprep.subr.bf16.mxu0 0
        %398 = vmatpush1.bf16.msra.mxu0 0
        %399 = vmatprep.subr.bf16.mxu0 0
        %400 = vmatpush1.bf16.msra.mxu0 0
        %401 = vmatprep.mubr.bf16.mxu0 0
        %402 = vmatmul.mubr.bf16.gmra.mrb[0].mxu0 %v304
        %v403 = vpop.f32.mrb[0].mxu0
        %v404 = vadd.f32 0.0, %v403
        %v405 = vpop.f32.mrb[0].mxu0
        %v406 = vpop.f32.mrb[0].mxu0
        %v407 = vpop.f32.mrb[0].mxu0
        %408 = vdwg.mxu0
        %v409 = vadd.f32 %v303, %v404
        %410 = vst.msk [vmem:[%s215] sm:$0xff] %vm230, %v409
        %v411 = vld [vmem:[%s1 + $0x4] sm:$0xf]
        %v412 = vld [vmem:[%s1 + $0xc] sm:$0xf]
        %v413 = vld [vmem:[%s1 + $0x14] sm:$0xf]
        %v414 = vld [vmem:[%s1 + $0x1c] sm:$0xf]
        %v415 = vld [vmem:[%s2 + $0x1] sm:$0x1]
        %v417 = vlaneseq
        %v418 = vshrl.u32 %v417, 7
        %v419 = vsub.s32 0, %v418
        %v420 = vrot.slane %v415, %v419
        %v426 = vunpack.c.l.b16 %v411
        %v427 = vunpack.c.l.b16 %v412
        %v428 = vunpack.c.l.b16 %v413
        %v429 = vunpack.c.l.b16 %v414
        %v430 = vpack.c.b16 %v427, %v426
        %v431 = vpack.c.b16 %v429, %v428
        %434 = vmatprep.subr.bf16.mxu0 0
        %435 = vmatpush1.bf16.msra.mxu0 %v430
        %436 = vmatprep.subr.bf16.mxu0 0
        %437 = vmatpush1.bf16.msra.mxu0 %v431
        %438 = vmatprep.subr.bf16.mxu0 0
        %439 = vmatpush1.bf16.msra.mxu0 0
        %440 = vmatprep.subr.bf16.mxu0 0
        %441 = vmatpush1.bf16.msra.mxu0 0
        %442 = vmatprep.subr.bf16.mxu0 0
        %443 = vmatpush1.bf16.msra.mxu0 0
        %444 = vmatprep.subr.bf16.mxu0 0
        %445 = vmatpush1.bf16.msra.mxu0 0
        %446 = vmatprep.subr.bf16.mxu0 0
        %447 = vmatpush1.bf16.msra.mxu0 0
        %448 = vmatprep.subr.bf16.mxu0 0
        %449 = vmatpush1.bf16.msra.mxu0 0
        %450 = vmatprep.subr.bf16.mxu0 0
        %451 = vmatpush1.bf16.msra.mxu0 0
        %452 = vmatprep.subr.bf16.mxu0 0
        %453 = vmatpush1.bf16.msra.mxu0 0
        %454 = vmatprep.subr.bf16.mxu0 0
        %455 = vmatpush1.bf16.msra.mxu0 0
        %456 = vmatprep.subr.bf16.mxu0 0
        %457 = vmatpush1.bf16.msra.mxu0 0
        %458 = vmatprep.subr.bf16.mxu0 0
        %459 = vmatpush1.bf16.msra.mxu0 0
        %460 = vmatprep.subr.bf16.mxu0 0
        %461 = vmatpush1.bf16.msra.mxu0 0
        %462 = vmatprep.subr.bf16.mxu0 0
        %463 = vmatpush1.bf16.msra.mxu0 0
        %464 = vmatprep.subr.bf16.mxu0 0
        %465 = vmatpush1.bf16.msra.mxu0 0
        %466 = vmatprep.mubr.bf16.mxu0 0
        %467 = vmatmul.mubr.bf16.gmra.mrb[0].mxu0 %v256
        %v468 = vpop.f32.mrb[0].mxu0
        %v469 = vadd.f32 %v420, %v468
        %v470 = vpop.f32.mrb[0].mxu0
        %v471 = vpop.f32.mrb[0].mxu0
        %v472 = vpop.f32.mrb[0].mxu0
        %473 = vdwg.mxu0
        %v474 = vmul.f32 %v469, 0.5
        %v475 = vmul.f32 %v469, 0.70710677
        %v476 = verf.f32.pop %v475
        %v477 = vadd.f32 %v476, 1.0
        %v478 = vmul.f32 %v474, %v477
        %v479 = vld [vmem:[%s215] sm:$0xff]
        %v480 = vpack.c.bf16 %v478, %v478
        %v481 = vld [vmem:[%s3 + $0x40] sm:$0xf]
        %v482 = vld [vmem:[%s3 + $0x44] sm:$0xf]
        %v483 = vld [vmem:[%s3 + $0x48] sm:$0xf]
        %v484 = vld [vmem:[%s3 + $0x4c] sm:$0xf]
        %v485 = vld [vmem:[%s3 + $0x50] sm:$0xf]
        %v486 = vld [vmem:[%s3 + $0x54] sm:$0xf]
        %v487 = vld [vmem:[%s3 + $0x58] sm:$0xf]
        %v488 = vld [vmem:[%s3 + $0x5c] sm:$0xf]
        %v489 = vld [vmem:[%s3 + $0x60] sm:$0xf]
        %v490 = vld [vmem:[%s3 + $0x64] sm:$0xf]
        %v491 = vld [vmem:[%s3 + $0x68] sm:$0xf]
        %v492 = vld [vmem:[%s3 + $0x6c] sm:$0xf]
        %v493 = vld [vmem:[%s3 + $0x70] sm:$0xf]
        %v494 = vld [vmem:[%s3 + $0x74] sm:$0xf]
        %v495 = vld [vmem:[%s3 + $0x78] sm:$0xf]
        %v496 = vld [vmem:[%s3 + $0x7c] sm:$0xf]
        %v513 = vunpack.c.l.b16 %v481
        %v514 = vunpack.c.l.b16 %v482
        %v515 = vunpack.c.l.b16 %v483
        %v516 = vunpack.c.l.b16 %v484
        %v517 = vunpack.c.l.b16 %v485
        %v518 = vunpack.c.l.b16 %v486
        %v519 = vunpack.c.l.b16 %v487
        %v520 = vunpack.c.l.b16 %v488
        %v521 = vunpack.c.l.b16 %v489
        %v522 = vunpack.c.l.b16 %v490
        %v523 = vunpack.c.l.b16 %v491
        %v524 = vunpack.c.l.b16 %v492
        %v525 = vunpack.c.l.b16 %v493
        %v526 = vunpack.c.l.b16 %v494
        %v527 = vunpack.c.l.b16 %v495
        %v528 = vunpack.c.l.b16 %v496
        %v529 = vpack.c.b16 %v514, %v513
        %v530 = vpack.c.b16 %v516, %v515
        %v531 = vpack.c.b16 %v518, %v517
        %v532 = vpack.c.b16 %v520, %v519
        %v533 = vpack.c.b16 %v522, %v521
        %v534 = vpack.c.b16 %v524, %v523
        %v535 = vpack.c.b16 %v526, %v525
        %v536 = vpack.c.b16 %v528, %v527
        %545 = vmatprep.subr.bf16.mxu0 0
        %546 = vmatpush1.bf16.msra.mxu0 %v529
        %547 = vmatprep.subr.bf16.mxu0 0
        %548 = vmatpush1.bf16.msra.mxu0 %v530
        %549 = vmatprep.subr.bf16.mxu0 0
        %550 = vmatpush1.bf16.msra.mxu0 %v531
        %551 = vmatprep.subr.bf16.mxu0 0
        %552 = vmatpush1.bf16.msra.mxu0 %v532
        %553 = vmatprep.subr.bf16.mxu0 0
        %554 = vmatpush1.bf16.msra.mxu0 %v533
        %555 = vmatprep.subr.bf16.mxu0 0
        %556 = vmatpush1.bf16.msra.mxu0 %v534
        %557 = vmatprep.subr.bf16.mxu0 0
        %558 = vmatpush1.bf16.msra.mxu0 %v535
        %559 = vmatprep.subr.bf16.mxu0 0
        %560 = vmatpush1.bf16.msra.mxu0 %v536
        %561 = vmatprep.subr.bf16.mxu0 0
        %562 = vmatpush1.bf16.msra.mxu0 0
        %563 = vmatprep.subr.bf16.mxu0 0
        %564 = vmatpush1.bf16.msra.mxu0 0
        %565 = vmatprep.subr.bf16.mxu0 0
        %566 = vmatpush1.bf16.msra.mxu0 0
        %567 = vmatprep.subr.bf16.mxu0 0
        %568 = vmatpush1.bf16.msra.mxu0 0
        %569 = vmatprep.subr.bf16.mxu0 0
        %570 = vmatpush1.bf16.msra.mxu0 0
        %571 = vmatprep.subr.bf16.mxu0 0
        %572 = vmatpush1.bf16.msra.mxu0 0
        %573 = vmatprep.subr.bf16.mxu0 0
        %574 = vmatpush1.bf16.msra.mxu0 0
        %575 = vmatprep.subr.bf16.mxu0 0
        %576 = vmatpush1.bf16.msra.mxu0 0
        %577 = vmatprep.mubr.bf16.mxu0 0
        %578 = vmatmul.mubr.bf16.gmra.mrb[0].mxu0 %v480
        %v579 = vpop.f32.mrb[0].mxu0
        %v580 = vadd.f32 0.0, %v579
        %v581 = vpop.f32.mrb[0].mxu0
        %v582 = vpop.f32.mrb[0].mxu0
        %v583 = vpop.f32.mrb[0].mxu0
        %584 = vdwg.mxu0
        %v585 = vadd.f32 %v479, %v580
        %586 = vst.msk [vmem:[%s215] sm:$0xff] %vm230, %v585
        %s587 = sand.u32 %s137, 1
        %s588 = scalar_lea.sflag [#allocation3], %s587
        %s589 = sand.u32 %s137, 1
        %s590 = smul.addr %s589, 8
        %s591 = scalar_lea.vmem [#allocation2], %s590
        // Predicated region
        $region41: #{tpu_custom_call.1} parent=39 // pred_check
          %p592 = pneg %p147
        $region42: #{tpu_custom_call.1} parent=39 // pred_check_branch
          %594 = sbr.rel (%p592) target = $region44
        $region43: #{tpu_custom_call.1} parent=39 // pred_region
          %s596 = ssub.s32 128, 128
          %597 = vsyncadd %s588, %s596
          %s598 = smul.addr %s19, 128
          %s599 = scalar_lea.hbm %s5, %s598
          %s601 = sshll.u32 %s591, 4
          %s602 = int_to_ptr.vmem [resolvable:$true] %s601
          %604 = dma.vmem_to_hbm [thread:$0]  %s602, 128, %s599, %s588
        $region44: #{tpu_custom_call.1} parent=39 // pred_fallthru
          _
      $region40: #{tpu_custom_call.1} parent=5 // pred_fallthru
        _
      %p605 = scmp.le.s32.totalorder 2, %s14
      // Predicated region
      $region45: #{tpu_custom_call.1} parent=5 // pred_check
        %p606 = pneg %p605
      $region46: #{tpu_custom_call.1} parent=5 // pred_check_branch
        %608 = sbr.rel (%p606) target = $region48
      $region47: #{tpu_custom_call.1} parent=5 // pred_region
        %s609 = ssub.s32 %s14, 2
        // Predicated region
        $region49: #{tpu_custom_call.1} parent=47 // pred_check
          %p610 = pneg %p153
        $region50: #{tpu_custom_call.1} parent=47 // pred_check_branch
          %612 = sbr.rel (%p610) target = $region52
        $region51: #{tpu_custom_call.1} parent=47 // pred_region
          %s613 = sand.u32 %s138, 1
          %s614 = scalar_lea.sflag [#allocation3], %s613
          %s615 = sand.u32 %s138, 1
          %s616 = smul.addr %s615, 8
          %s617 = scalar_lea.vmem [#allocation2], %s616
          %618 = dma.done %s614, 128
        $region52: #{tpu_custom_call.1} parent=47 // pred_fallthru
          _
      $region48: #{tpu_custom_call.1} parent=5 // pred_fallthru
        _
    $region6: #{tpu_custom_call.1} parent=1 // loop_footer
      %s18 = sadd.s32 1, %s14
    $region7: #{tpu_custom_call.1} parent=1 // loop_footer_branch
      %13 = sbr.rel target = $region3
    $region8: #{tpu_custom_call.1} parent=1 // loop_exit
      _
    %619 = vsyncpa [#allocation3], 1
    %s620 = scalar_lea.sflag [#allocation3], 1
    %621 = vsyncpa %s620, 1

</llo_original>
